<compile_context>
chip_gen: v7x
topology: tpu7x:2x2x1
jax: 0.10.0
libtpu: 0.0.40
codegen_flags: <defaults>
</compile_context>

<pallas_src>
import functools

import jax
import jax.numpy as jnp
import numpy as np
from jax.experimental import pallas as pl
from jax.experimental.pallas import tpu as pltpu

_SQRT1_2 = 0.7071067811865476
_LANES = 128


# ----------------------------- in-kernel helpers -----------------------------

def _erf(x):
    # Abramowitz & Stegun 7.1.26 (|err| < 1.5e-7).  Exact reciprocal here keeps
    # the stacked-approximation error on the GELU path negligible.
    a1, a2, a3, a4, a5 = 0.254829592, -0.284496736, 1.421413741, -1.453152027, 1.061405429
    p = 0.3275911
    sgn = jnp.where(x >= 0.0, 1.0, -1.0)
    ax = jnp.abs(x)
    t = 1.0 / (1.0 + p * ax)
    poly = ((((a5 * t + a4) * t + a3) * t + a2) * t + a1) * t
    return sgn * (1.0 - poly * jnp.exp(-ax * ax))


def _gelu(x):
    # erf-form GELU, matching torch.nn.GELU's default.
    return 0.5 * x * (1.0 + _erf(x * _SQRT1_2))


def _sigmoid(x):
    # Numerically stable for all x: sigmoid(x) = 0.5 * (1 + tanh(x/2)) (EUP op).
    return 0.5 * (jnp.tanh(0.5 * x) + 1.0)


def _softmax_lastdim(e):
    m = jnp.max(e, axis=-1, keepdims=True)
    z = jnp.exp(e - m)
    return z * pl.reciprocal(jnp.sum(z, axis=-1, keepdims=True), approx=True)


def _layernorm(h, g, b, eps=1e-5):
    mu = jnp.mean(h, axis=-1, keepdims=True)
    var = jnp.mean((h - mu) ** 2, axis=-1, keepdims=True)
    return (h - mu) * jax.lax.rsqrt(var + eps) * g + b


# --------------------------------- kernel ------------------------------------

def synth_encoder_kernel(x_ref, w_ref, o_ref, *, layout, tr, cr,
                         reduce_token, reduce_channel, mxu_dtype):
    f32 = jnp.float32
    TB, T, C = x_ref.shape
    Tr, Cr = tr, cr

    def getp(name):
        r0, c0, nr, nc = layout[name]          # static (row, col, rows, cols)
        if c0 == 0:
            return w_ref[r0:r0 + nr, 0:nc]
        return w_ref[r0:r0 + nr, :][:, c0:c0 + nc]

    def dot(a, b):
        return jnp.dot(a.astype(mxu_dtype), b.astype(mxu_dtype),
                       preferred_element_type=f32)

    def bmm(a, b):
        return jnp.einsum("bik,bkj->bij", a.astype(mxu_dtype), b.astype(mxu_dtype),
                          preferred_element_type=f32)

    def left_apply(w, x):
        # per-batch (R, T) @ x[b] (T, C) -> (TB, R, C) with the shared weight
        # kept stationary (no materialized TB weight copies).
        if TB <= 8:
            return jnp.stack([dot(w, x[b]) for b in range(TB)], axis=0)
        return jnp.einsum("rt,btc->brc", w.astype(mxu_dtype), x.astype(mxu_dtype),
                          preferred_element_type=f32)

    x3 = x_ref[...].astype(f32)                # (TB, T, C)
    xf = x3.reshape(TB * T, C)                 # batch folded into the matmul M dim

    # ---- one fused dot: token energy + (optional) channel value-reduce ------
    ev = dot(xf, getp("wxcat")) + getp("bxcat")            # (TB*T, Tr [+ Cr])
    e_t = ev[:, 0:Tr].reshape(TB, T, Tr)

    # ----------------------- token-mixing SynthAttention ---------------------
    # SELayer over the token axis: VPU broadcast-mul + keepdims reductions.
    y = jnp.mean(e_t, axis=-1, keepdims=True)                                        # (TB, T, 1)
    h = jnp.maximum(jnp.sum(y * getp("se1tT")[None], axis=1, keepdims=True), 0.0)    # (TB, 1, T/4)
    s_tok = _sigmoid(jnp.sum(h * getp("se2t")[None], axis=-1, keepdims=True))        # (TB, T, 1)
    attn_t = _softmax_lastdim(e_t * s_tok)                                           # (TB, T, Tr)

    if reduce_token > 1:
        # attn @ (Wv x + b) == (attn @ Wv) @ x + attn @ b  -> flattened
        # weight-stationary dot + the bmm that already existed.
        aw = dot(attn_t.reshape(TB * T, Tr), getp("wvrt")).reshape(TB, T, T)
        ab = jnp.sum(attn_t * getp("bvrtT")[None], axis=-1, keepdims=True)           # (TB, T, 1)
        t_tc = bmm(aw, x3) + ab                                                      # (TB, T, C)
    else:
        t_tc = bmm(attn_t, x3)

    # ---------------------- channel-mixing SynthAttention --------------------
    # Computed in (reduced-channel rows, C lanes) layout with pre-transposed
    # weights so neither x nor the branch output is transposed in VMEM.
    e_c = left_apply(getp("wdcT"), x3) + getp("bdcT")[None]                          # (TB, Cr, C)

    yc = jnp.mean(e_c, axis=1, keepdims=True)                                        # (TB, 1, C)
    hc = jnp.maximum(jnp.sum(yc * getp("se1c")[None], axis=-1, keepdims=True), 0.0)  # (TB, C/4, 1)
    s_ch = _sigmoid(jnp.sum(hc * getp("se2cT")[None], axis=1, keepdims=True))        # (TB, 1, C)
    e_c = e_c * s_ch
    # softmax over the reduced-channel axis (axis 1)
    mc = jnp.max(e_c, axis=1, keepdims=True)
    zc = jnp.exp(e_c - mc)
    attn_c = zc * pl.reciprocal(jnp.sum(zc, axis=1, keepdims=True), approx=True)     # (TB, Cr, C)

    if reduce_channel > 1:
        v_c = ev[:, Tr:Tr + Cr].reshape(TB, T, Cr)                                   # from fused dot
    else:
        v_c = x3
    c_tc = bmm(v_c, attn_c)                                                          # (TB, T, C)

    # ----------------------- reweight MLP + branch fusion --------------------
    a = jnp.mean(t_tc + c_tc, axis=-1, keepdims=True)                                # (TB, T, 1)
    a1 = _gelu(jnp.sum(a * getp("wr1T")[None], axis=1, keepdims=True)
               + getp("br1T")[None])                                                 # (TB, 1, T/4)
    lt = jnp.sum(a1 * getp("wr2t")[None], axis=-1, keepdims=True) + getp("br2t")[None]
    lc = jnp.sum(a1 * getp("wr2c")[None], axis=-1, keepdims=True) + getp("br2c")[None]
    mm = jnp.maximum(lt, lc)                   # 2-way softmax, exact reciprocal
    et = jnp.exp(lt - mm)
    ec = jnp.exp(lc - mm)
    inv = 1.0 / (et + ec)
    x_mix = t_tc * (et * inv) + c_tc * (ec * inv)                                    # (TB, T, C)

    x_att = dot(x_mix.reshape(TB * T, C), getp("wproj")) + getp("bproj")             # (TB*T, C)

    # ---------------------- residual + norm1 + FFN + norm2 -------------------
    y1 = _layernorm(xf + x_att, getp("g1"), getp("be1"))
    f = _gelu(dot(y1, getp("wf1")) + getp("bf1"))
    f = dot(f, getp("wf2")) + getp("bf2")
    y2 = _layernorm(y1 + f, getp("g2"), getp("be2"))

    o_ref[...] = y2.reshape(TB, T, C).astype(o_ref.dtype)


# ------------------------ host-side parameter packing -------------------------

def pack_params(params, *, reduce_token, reduce_channel):
    """Pack every parameter into one compact (R, 128) f32 slab (single DMA).

    * Entries whose kernel-side use wants a transposed orientation are stored
      transposed here, so the kernel never transposes anything in VMEM.
    * The token-energy weight (wdt) and channel value-reduce weight (wvrc^T)
      are column-concatenated into "wxcat" so the kernel issues ONE fused dot
      for both (same for their biases, "bxcat").
    * Narrow entries share the 128 lanes of an 8-row-aligned "shelf" instead of
      each occupying a full 8x128 block (~4x smaller resident slab).
    Returns (slab, layout); layout[name] = (row0, col0, rows, cols), all static.
    """
    f = lambda a: np.asarray(a, np.float32)
    entries = {}
    if reduce_channel > 1:
        entries["wxcat"] = np.concatenate([f(params["wdt"]), f(params["wvrc"]).T], axis=1)
        entries["bxcat"] = np.concatenate([f(params["bdt"]), f(params["bvrc"]).T], axis=1)
    else:
        entries["wxcat"] = f(params["wdt"])
        entries["bxcat"] = f(params["bdt"])
    entries["se1tT"] = f(params["se1t"]).T
    entries["se2t"] = f(params["se2t"])
    if reduce_token > 1:
        entries["wvrt"] = f(params["wvrt"])
        entries["bvrtT"] = f(params["bvrt"]).T
    entries["wdcT"] = f(params["wdc"]).T
    entries["bdcT"] = f(params["bdc"]).T
    entries["se1c"] = f(params["se1c"])
    entries["se2cT"] = f(params["se2c"]).T
    entries["wr1T"] = f(params["wr1"]).T
    entries["br1T"] = f(params["br1"]).T
    entries["wr2t"] = f(params["wr2t"])
    entries["br2t"] = f(params["br2t"])
    entries["wr2c"] = f(params["wr2c"])
    entries["br2c"] = f(params["br2c"])
    entries["wproj"] = f(params["wproj"])
    entries["bproj"] = f(params["bproj"])
    entries["wf1"] = f(params["wf1"])
    entries["bf1"] = f(params["bf1"])
    entries["wf2"] = f(params["wf2"])
    entries["bf2"] = f(params["bf2"])
    entries["g1"] = f(params["g1"])
    entries["be1"] = f(params["be1"])
    entries["g2"] = f(params["g2"])
    entries["be2"] = f(params["be2"])

    max_nc = max(w.shape[1] for w in entries.values())
    lanes = max(_LANES, -(-max_nc // _LANES) * _LANES)

    # Greedy shelf packing: tallest/widest first; an entry joins the first
    # shelf that is tall enough and still has lanes left, else opens a new one.
    names = sorted(entries, key=lambda n: (-entries[n].shape[0], -entries[n].shape[1]))
    shelves = []                 # [row0, height, lanes_used]
    layout, total_rows = {}, 0
    for n in names:
        nr, nc = entries[n].shape
        for sh in shelves:
            if nr <= sh[1] and sh[2] + nc <= lanes:
                layout[n] = (sh[0], sh[2], nr, nc)
                sh[2] += nc
                break
        else:
            h = -(-nr // 8) * 8
            layout[n] = (total_rows, 0, nr, nc)
            shelves.append([total_rows, h, nc])
            total_rows += h

    slab = np.zeros((total_rows, lanes), np.float32)
    for n, w in entries.items():
        r0, c0, nr, nc = layout[n]
        slab[r0:r0 + nr, c0:c0 + nc] = w
    return jnp.asarray(slab), layout


# --------------------------------- wrapper ------------------------------------

def synth_encoder_layer(x, params, *, reduce_token, reduce_channel,
                        block_b=None, mxu_dtype=jnp.float32):
    B, T, C = x.shape
    Tr = params["wdt"].shape[1]
    Cr = params["wdc"].shape[1]
    H = params["wf1"].shape[1]

    slab, layout = pack_params(params, reduce_token=reduce_token,
                               reduce_channel=reduce_channel)

    if block_b is None:
        # Target ~2048 flattened rows per grid step (big MXU M, ~0.35us/step
        # overhead amortized), but keep >= 2 grid steps whenever B > 1 so the
        # "parallel" batch axis can shard across v7x's two TensorCores.
        block_b = max(1, min(B, 2048 // max(T, 1)))
        if B > 1:
            block_b = min(block_b, max(1, B // 2))
        while B % block_b:
            block_b -= 1
    grid = (B // block_b,)

    kernel = functools.partial(
        synth_encoder_kernel, layout=layout, tr=Tr, cr=Cr,
        reduce_token=reduce_token, reduce_channel=reduce_channel,
        mxu_dtype=mxu_dtype)

    # rough cost hint for XLA's scheduler
    macs = B * T * C * Tr                       # fused xf dot (token energy)
    if reduce_channel > 1:
        macs += B * T * C * Cr                  # fused xf dot (channel value-reduce)
    macs += B * Cr * T * C + B * T * Cr * C     # channel energy + v_c @ attn_c
    if reduce_token > 1:
        macs += B * T * Tr * T + B * T * T * C  # (attn@Wv) then @ x
    else:
        macs += B * T * T * C
    macs += B * T * C * C                       # proj
    macs += 2 * B * T * C * H                   # FFN
    cost = pl.CostEstimate(
        flops=2 * macs + 40 * B * T * C,
        transcendentals=B * T * (Tr + H + 8) + B * Cr * C + 4 * B * (T + C),
        bytes_accessed=4 * (2 * B * T * C + int(slab.size)),
    )

    # Only override the scoped-VMEM default when the per-step footprint
    # (double-buffered io blocks + resident slab + intermediates) could exceed it.
    block_bytes = 4 * block_b * T * C
    need = 4 * block_bytes + 8 * int(slab.size) + 24 * block_bytes
    vmem_limit = min(int(need * 1.5), 96 << 20) if need > (12 << 20) else None

    return pl.pallas_call(
        kernel,
        out_shape=jax.ShapeDtypeStruct((B, T, C), jnp.float32),
        grid=grid,
        in_specs=[
            pl.BlockSpec((block_b, T, C), lambda i: (i, 0, 0)),
            # whole slab, constant block index -> fetched once, stays resident
            pl.BlockSpec(slab.shape, lambda i: (0, 0)),
        ],
        out_specs=pl.BlockSpec((block_b, T, C), lambda i: (i, 0, 0)),
        compiler_params=pltpu.CompilerParams(
            dimension_semantics=("parallel",),
            vmem_limit_bytes=vmem_limit),
        cost_estimate=cost,
    )(x, slab)


# ------------------------- deterministic parameter init ----------------------

def init_params(key, d_model, temporal_dim, expansion_factor, reduce_token, reduce_channel):
    C, T = d_model, temporal_dim
    Tr, Cr = T // reduce_token, C // reduce_channel
    H = C * expansion_factor

    def nrm(k, shape, scale=0.05):
        return scale * jax.random.normal(k, shape, jnp.float32)

    ks = jax.random.split(key, 24)
    p = {}
    # SynthAttention(token): dense (in,out), SE weights (out,in), value_reduce (out,in)
    p["wdt"] = nrm(ks[0], (C, Tr));          p["bdt"] = nrm(ks[1], (1, Tr))
    p["se1t"] = nrm(ks[2], (T // 4, T));     p["se2t"] = nrm(ks[3], (T, T // 4))
    p["wvrt"] = nrm(ks[4], (Tr, T));         p["bvrt"] = nrm(ks[5], (Tr, 1))
    # SynthAttention(channel)
    p["wdc"] = nrm(ks[6], (T, Cr));          p["bdc"] = nrm(ks[7], (1, Cr))
    p["se1c"] = nrm(ks[8], (C // 4, C));     p["se2c"] = nrm(ks[9], (C, C // 4))
    p["wvrc"] = nrm(ks[10], (Cr, C));        p["bvrc"] = nrm(ks[11], (Cr, 1))
    # reweight Mlp (fc2 stored as two (T, T//4) branch matrices)
    p["wr1"] = nrm(ks[12], (T // 4, T));     p["br1"] = nrm(ks[13], (T // 4, 1))
    p["wr2t"] = nrm(ks[14], (T, T // 4));    p["br2t"] = nrm(ks[15], (T, 1))
    p["wr2c"] = nrm(ks[16], (T, T // 4));    p["br2c"] = nrm(ks[17], (T, 1))
    # proj
    p["wproj"] = nrm(ks[18], (C, C));        p["bproj"] = nrm(ks[19], (1, C))
    # feed-forward
    p["wf1"] = nrm(ks[20], (C, H));          p["bf1"] = nrm(ks[21], (1, H))
    p["wf2"] = nrm(ks[22], (H, C));          p["bf2"] = nrm(ks[23], (1, C))
    # LayerNorms
    p["g1"] = jnp.ones((1, C), jnp.float32); p["be1"] = jnp.zeros((1, C), jnp.float32)
    p["g2"] = jnp.ones((1, C), jnp.float32); p["be2"] = jnp.zeros((1, C), jnp.float32)
    return p


# ------------------------------ pure-JAX reference ---------------------------

def ref_forward(x, p, *, reduce_token, reduce_channel):
    # mirrors the PyTorch SynthEncoderLayer forward (eval mode; dropout = identity)
    gelu = lambda v: 0.5 * v * (1.0 + jax.scipy.special.erf(v * _SQRT1_2))
    softmax = lambda v: jax.nn.softmax(v, axis=-1)

    def ln(v, g, b):
        mu = v.mean(-1, keepdims=True)
        var = ((v - mu) ** 2).mean(-1, keepdims=True)
        return (v - mu) / jnp.sqrt(var + 1e-5) * g + b

    xT = jnp.swapaxes(x, 1, 2)                                   # (B, C, T)

    # token branch
    e_t = x @ p["wdt"] + p["bdt"]                                # (B, T, Tr)
    y = e_t.mean(-1)                                             # (B, T)
    s = jax.nn.sigmoid(jnp.maximum(y @ p["se1t"].T, 0) @ p["se2t"].T)
    e_t = e_t * s[..., None]
    attn_t = softmax(e_t)
    if reduce_token > 1:
        v_t = jnp.einsum("rt,btc->brc", p["wvrt"], x) + p["bvrt"][None]
    else:
        v_t = x
    t_tc = jnp.einsum("btr,brc->btc", attn_t, v_t)               # (B, T, C)

    # channel branch
    e_c = xT @ p["wdc"] + p["bdc"]                               # (B, C, Cr)
    yc = e_c.mean(-1)
    sc = jax.nn.sigmoid(jnp.maximum(yc @ p["se1c"].T, 0) @ p["se2c"].T)
    e_c = e_c * sc[..., None]
    attn_c = softmax(e_c)
    if reduce_channel > 1:
        v_c = jnp.einsum("rc,bct->brt", p["wvrc"], xT) + p["bvrc"][None]
    else:
        v_c = xT
    c_ct = jnp.einsum("bcr,brt->bct", attn_c, v_c)               # (B, C, T)
    c_tc = jnp.swapaxes(c_ct, 1, 2)                              # (B, T, C)

    # reweight + fusion
    a = (t_tc + c_tc).mean(-1)                                   # (B, T)
    a1 = gelu(a @ p["wr1"].T + p["br1"][:, 0])                   # (B, T//4)
    lt = a1 @ p["wr2t"].T + p["br2t"][:, 0]                      # (B, T)
    lc = a1 @ p["wr2c"].T + p["br2c"][:, 0]
    w = jax.nn.softmax(jnp.stack([lt, lc], 0), axis=0)           # (2, B, T)
    x_mix = t_tc * w[0][..., None] + c_tc * w[1][..., None]
    x_att = x_mix @ p["wproj"] + p["bproj"]

    y1 = ln(x + x_att, p["g1"], p["be1"])
    f = gelu(y1 @ p["wf1"] + p["bf1"]) @ p["wf2"] + p["bf2"]
    return ln(y1 + f, p["g2"], p["be2"])


# ----------------------------------- main -------------------------------------

if __name__ == "__main__":
    # SynthEncoderLayer(d_model=32, expansion_factor=2, dropout=0.0,
    #                   temporal_dim=8, reduce_token=2, reduce_channel=2)
    B, T, C = 2, 8, 32
    expansion_factor, reduce_token, reduce_channel = 2, 2, 2

    key = jax.random.PRNGKey(0)
    kx, kp = jax.random.split(key)
    x = jax.random.normal(kx, (B, T, C), jnp.float32)
    params = init_params(kp, C, T, expansion_factor, reduce_token, reduce_channel)

    out = synth_encoder_layer(x, params,
                              reduce_token=reduce_token,
                              reduce_channel=reduce_channel)
    out = jax.block_until_ready(out)

    ref = ref_forward(x, params,
                      reduce_token=reduce_token,
                      reduce_channel=reduce_channel)
    np.testing.assert_allclose(np.asarray(out), np.asarray(ref), atol=2e-3, rtol=2e-3)

    print("KERNEL_OK")
</pallas_src>

<mosaic_0001>
module attributes {stable_mosaic.version = 11 : i64} {
  func.func @synth_encoder_kernel(%arg0: i32, %arg1: memref<1x8x32xf32, #tpu.memory_space<vmem>>, %arg2: memref<120x128xf32, #tpu.memory_space<vmem>>, %arg3: memref<1x8x32xf32, #tpu.memory_space<vmem>>) attributes {dimension_semantics = [#tpu.dimension_semantics<parallel>], iteration_bounds = array<i64: 2>, scalar_prefetch = 0 : i64, scratch_operands = 0 : i64, tpu.core_type = #tpu.core_type<tc>, window_params = [{transform_indices = @transform_0, window_bounds = array<i64: 1, 8, 32>}, {pipeline_mode = #tpu.pipeline_mode<synchronous>, transform_indices = @transform_1, window_bounds = array<i64: 120, 128>}, {transform_indices = @transform_2, window_bounds = array<i64: 1, 8, 32>}]} {
    %c0 = arith.constant 0 : index
    %c0_0 = arith.constant 0 : index
    %c0_1 = arith.constant 0 : index
    %0 = vector.load %arg1[%c0, %c0_0, %c0_1] : memref<1x8x32xf32, #tpu.memory_space<vmem>>, vector<1x8x32xf32>
    %1 = vector.shape_cast %0 : vector<1x8x32xf32> to vector<8x32xf32>
    %c64 = arith.constant 64 : index
    %c0_2 = arith.constant 0 : index
    %2 = vector.load %arg2[%c64, %c0_2] : memref<120x128xf32, #tpu.memory_space<vmem>>, vector<32x20xf32>
    %cst = arith.constant dense<0.000000e+00> : vector<8x20xf32>
    %3 = tpu.matmul %1, %2, %cst {dimension_numbers = #tpu.dot_dimension_numbers<[1], [0], [0], [1], [0, 0, 1, 1], [], []>} : vector<8x32xf32>, vector<32x20xf32>, vector<8x20xf32> -> vector<8x20xf32>
    %c112 = arith.constant 112 : index
    %c0_3 = arith.constant 0 : index
    %4 = vector.load %arg2[%c112, %c0_3] : memref<120x128xf32, #tpu.memory_space<vmem>>, vector<1x20xf32>
    %5 = vector.broadcast %4 : vector<1x20xf32> to vector<8x20xf32>
    %6 = arith.addf %3, %5 : vector<8x20xf32>
    %7 = vector.extract_strided_slice %6 {offsets = [0, 0], sizes = [8, 4], strides = [1, 1]} : vector<8x20xf32> to vector<8x4xf32>
    %8 = vector.shape_cast %7 : vector<8x4xf32> to vector<1x8x4xf32>
    %cst_4 = arith.constant dense<0.000000e+00> : vector<1x8xf32>
    %9 = vector.multi_reduction <add>, %8, %cst_4 [2] : vector<1x8x4xf32> to vector<1x8xf32>
    %10 = vector.shape_cast %9 : vector<1x8xf32> to vector<1x8x1xf32>
    %cst_5 = arith.constant 4.000000e+00 : f32
    %11 = vector.broadcast %cst_5 : f32 to vector<1x8x1xf32>
    %12 = arith.divf %10, %11 : vector<1x8x1xf32>
    %c64_6 = arith.constant 64 : index
    %c0_7 = arith.constant 0 : index
    %13 = vector.load %arg2[%c64_6, %c0_7] : memref<120x128xf32, #tpu.memory_space<vmem>>, vector<8x128xf32>
    %14 = vector.extract_strided_slice %13 {offsets = [0, 93], sizes = [8, 2], strides = [1, 1]} : vector<8x128xf32> to vector<8x2xf32>
    %15 = vector.shape_cast %14 : vector<8x2xf32> to vector<1x8x2xf32>
    %16 = vector.broadcast %12 : vector<1x8x1xf32> to vector<1x8x2xf32>
    %17 = arith.mulf %16, %15 : vector<1x8x2xf32>
    %cst_8 = arith.constant dense<0.000000e+00> : vector<1x2xf32>
    %18 = vector.multi_reduction <add>, %17, %cst_8 [1] : vector<1x8x2xf32> to vector<1x2xf32>
    %19 = vector.shape_cast %18 : vector<1x2xf32> to vector<1x1x2xf32>
    %cst_9 = arith.constant 0.000000e+00 : f32
    %20 = vector.broadcast %cst_9 : f32 to vector<1x1x2xf32>
    %21 = arith.maximumf %19, %20 : vector<1x1x2xf32>
    %c64_10 = arith.constant 64 : index
    %c0_11 = arith.constant 0 : index
    %22 = vector.load %arg2[%c64_10, %c0_11] : memref<120x128xf32, #tpu.memory_space<vmem>>, vector<8x128xf32>
    %23 = vector.extract_strided_slice %22 {offsets = [0, 95], sizes = [8, 2], strides = [1, 1]} : vector<8x128xf32> to vector<8x2xf32>
    %24 = vector.shape_cast %23 : vector<8x2xf32> to vector<1x8x2xf32>
    %25 = vector.broadcast %21 : vector<1x1x2xf32> to vector<1x8x2xf32>
    %26 = arith.mulf %25, %24 : vector<1x8x2xf32>
    %cst_12 = arith.constant dense<0.000000e+00> : vector<1x8xf32>
    %27 = vector.multi_reduction <add>, %26, %cst_12 [2] : vector<1x8x2xf32> to vector<1x8xf32>
    %28 = vector.shape_cast %27 : vector<1x8xf32> to vector<1x8x1xf32>
    %cst_13 = arith.constant 5.000000e-01 : f32
    %29 = vector.broadcast %cst_13 : f32 to vector<1x8x1xf32>
    %30 = arith.mulf %29, %28 : vector<1x8x1xf32>
    %31 = math.tanh %30 : vector<1x8x1xf32>
    %cst_14 = arith.constant 1.000000e+00 : f32
    %32 = vector.broadcast %cst_14 : f32 to vector<1x8x1xf32>
    %33 = arith.addf %31, %32 : vector<1x8x1xf32>
    %cst_15 = arith.constant 5.000000e-01 : f32
    %34 = vector.broadcast %cst_15 : f32 to vector<1x8x1xf32>
    %35 = arith.mulf %34, %33 : vector<1x8x1xf32>
    %36 = vector.broadcast %35 : vector<1x8x1xf32> to vector<1x8x4xf32>
    %37 = arith.mulf %8, %36 : vector<1x8x4xf32>
    %cst_16 = arith.constant dense<0xFF800000> : vector<1x8xf32>
    %38 = vector.multi_reduction <maximumf>, %37, %cst_16 [2] : vector<1x8x4xf32> to vector<1x8xf32>
    %39 = vector.shape_cast %38 : vector<1x8xf32> to vector<1x8x1xf32>
    %40 = vector.broadcast %39 : vector<1x8x1xf32> to vector<1x8x4xf32>
    %41 = arith.subf %37, %40 : vector<1x8x4xf32>
    %42 = math.exp %41 : vector<1x8x4xf32>
    %cst_17 = arith.constant dense<0.000000e+00> : vector<1x8xf32>
    %43 = vector.multi_reduction <add>, %42, %cst_17 [2] : vector<1x8x4xf32> to vector<1x8xf32>
    %44 = vector.shape_cast %43 : vector<1x8xf32> to vector<1x8x1xf32>
    %45 = tpu.reciprocal %44 {approx = true} : vector<1x8x1xf32> -> vector<1x8x1xf32>
    %46 = vector.broadcast %45 : vector<1x8x1xf32> to vector<1x8x4xf32>
    %47 = arith.mulf %42, %46 : vector<1x8x4xf32>
    %48 = vector.shape_cast %47 : vector<1x8x4xf32> to vector<8x4xf32>
    %c64_18 = arith.constant 64 : index
    %c0_19 = arith.constant 0 : index
    %49 = vector.load %arg2[%c64_18, %c0_19] : memref<120x128xf32, #tpu.memory_space<vmem>>, vector<4x128xf32>
    %50 = vector.extract_strided_slice %49 {offsets = [0, 105], sizes = [4, 8], strides = [1, 1]} : vector<4x128xf32> to vector<4x8xf32>
    %cst_20 = arith.constant dense<0.000000e+00> : vector<8x8xf32>
    %51 = tpu.matmul %48, %50, %cst_20 {dimension_numbers = #tpu.dot_dimension_numbers<[1], [0], [0], [1], [0, 0, 1, 1], [], []>} : vector<8x4xf32>, vector<4x8xf32>, vector<8x8xf32> -> vector<8x8xf32>
    %52 = vector.shape_cast %51 : vector<8x8xf32> to vector<1x8x8xf32>
    %c64_21 = arith.constant 64 : index
    %c0_22 = arith.constant 0 : index
    %53 = vector.load %arg2[%c64_21, %c0_22] : memref<120x128xf32, #tpu.memory_space<vmem>>, vector<1x128xf32>
    %54 = vector.extract_strided_slice %53 {offsets = [0, 113], sizes = [1, 4], strides = [1, 1]} : vector<1x128xf32> to vector<1x4xf32>
    %55 = vector.shape_cast %54 : vector<1x4xf32> to vector<1x1x4xf32>
    %56 = vector.broadcast %55 : vector<1x1x4xf32> to vector<1x8x4xf32>
    %57 = arith.mulf %47, %56 : vector<1x8x4xf32>
    %cst_23 = arith.constant dense<0.000000e+00> : vector<1x8xf32>
    %58 = vector.multi_reduction <add>, %57, %cst_23 [2] : vector<1x8x4xf32> to vector<1x8xf32>
    %59 = vector.shape_cast %58 : vector<1x8xf32> to vector<1x8x1xf32>
    "tpu.trace_start"() <{level = 10 : i32, message = "bik,bkj->bij"}> : () -> ()
    %cst_24 = arith.constant dense<0.000000e+00> : vector<1x8x32xf32>
    %60 = tpu.matmul %52, %0, %cst_24 {dimension_numbers = #tpu.dot_dimension_numbers<[2], [1], [1], [2], [0, 0, 0, 1, 1, 2], [0], [0]>} : vector<1x8x8xf32>, vector<1x8x32xf32>, vector<1x8x32xf32> -> vector<1x8x32xf32>
    "tpu.trace_stop"() : () -> ()
    %61 = vector.broadcast %59 : vector<1x8x1xf32> to vector<1x8x32xf32>
    %62 = arith.addf %60, %61 : vector<1x8x32xf32>
    %c64_25 = arith.constant 64 : index
    %c0_26 = arith.constant 0 : index
    %63 = vector.load %arg2[%c64_25, %c0_26] : memref<120x128xf32, #tpu.memory_space<vmem>>, vector<16x128xf32>
    %64 = vector.extract_strided_slice %63 {offsets = [0, 20], sizes = [16, 8], strides = [1, 1]} : vector<16x128xf32> to vector<16x8xf32>
    %65 = vector.shape_cast %0 : vector<1x8x32xf32> to vector<8x32xf32>
    %cst_27 = arith.constant dense<0.000000e+00> : vector<16x32xf32>
    %66 = tpu.matmul %64, %65, %cst_27 {dimension_numbers = #tpu.dot_dimension_numbers<[1], [0], [0], [1], [0, 0, 1, 1], [], []>} : vector<16x8xf32>, vector<8x32xf32>, vector<16x32xf32> -> vector<16x32xf32>
    %67 = vector.shape_cast %66 : vector<16x32xf32> to vector<1x16x32xf32>
    %c64_28 = arith.constant 64 : index
    %c0_29 = arith.constant 0 : index
    %68 = vector.load %arg2[%c64_28, %c0_29] : memref<120x128xf32, #tpu.memory_space<vmem>>, vector<16x128xf32>
    %69 = vector.extract_strided_slice %68 {offsets = [0, 28], sizes = [16, 1], strides = [1, 1]} : vector<16x128xf32> to vector<16x1xf32>
    %70 = vector.shape_cast %69 : vector<16x1xf32> to vector<1x16x1xf32>
    %71 = vector.broadcast %70 : vector<1x16x1xf32> to vector<1x16x32xf32>
    %72 = arith.addf %67, %71 : vector<1x16x32xf32>
    %cst_30 = arith.constant dense<0.000000e+00> : vector<1x32xf32>
    %73 = vector.multi_reduction <add>, %72, %cst_30 [1] : vector<1x16x32xf32> to vector<1x32xf32>
    %74 = vector.shape_cast %73 : vector<1x32xf32> to vector<1x1x32xf32>
    %cst_31 = arith.constant 1.600000e+01 : f32
    %75 = vector.broadcast %cst_31 : f32 to vector<1x1x32xf32>
    %76 = arith.divf %74, %75 : vector<1x1x32xf32>
    %c64_32 = arith.constant 64 : index
    %c0_33 = arith.constant 0 : index
    %77 = vector.load %arg2[%c64_32, %c0_33] : memref<120x128xf32, #tpu.memory_space<vmem>>, vector<8x128xf32>
    %78 = vector.extract_strided_slice %77 {offsets = [0, 29], sizes = [8, 32], strides = [1, 1]} : vector<8x128xf32> to vector<8x32xf32>
    %79 = vector.shape_cast %78 : vector<8x32xf32> to vector<1x8x32xf32>
    %80 = vector.broadcast %76 : vector<1x1x32xf32> to vector<1x8x32xf32>
    %81 = arith.mulf %80, %79 : vector<1x8x32xf32>
    %cst_34 = arith.constant dense<0.000000e+00> : vector<1x8xf32>
    %82 = vector.multi_reduction <add>, %81, %cst_34 [2] : vector<1x8x32xf32> to vector<1x8xf32>
    %83 = vector.shape_cast %82 : vector<1x8xf32> to vector<1x8x1xf32>
    %cst_35 = arith.constant 0.000000e+00 : f32
    %84 = vector.broadcast %cst_35 : f32 to vector<1x8x1xf32>
    %85 = arith.maximumf %83, %84 : vector<1x8x1xf32>
    %c64_36 = arith.constant 64 : index
    %c0_37 = arith.constant 0 : index
    %86 = vector.load %arg2[%c64_36, %c0_37] : memref<120x128xf32, #tpu.memory_space<vmem>>, vector<8x128xf32>
    %87 = vector.extract_strided_slice %86 {offsets = [0, 61], sizes = [8, 32], strides = [1, 1]} : vector<8x128xf32> to vector<8x32xf32>
    %88 = vector.shape_cast %87 : vector<8x32xf32> to vector<1x8x32xf32>
    %89 = vector.broadcast %85 : vector<1x8x1xf32> to vector<1x8x32xf32>
    %90 = arith.mulf %89, %88 : vector<1x8x32xf32>
    %cst_38 = arith.constant dense<0.000000e+00> : vector<1x32xf32>
    %91 = vector.multi_reduction <add>, %90, %cst_38 [1] : vector<1x8x32xf32> to vector<1x32xf32>
    %92 = vector.shape_cast %91 : vector<1x32xf32> to vector<1x1x32xf32>
    %cst_39 = arith.constant 5.000000e-01 : f32
    %93 = vector.broadcast %cst_39 : f32 to vector<1x1x32xf32>
    %94 = arith.mulf %93, %92 : vector<1x1x32xf32>
    %95 = math.tanh %94 : vector<1x1x32xf32>
    %cst_40 = arith.constant 1.000000e+00 : f32
    %96 = vector.broadcast %cst_40 : f32 to vector<1x1x32xf32>
    %97 = arith.addf %95, %96 : vector<1x1x32xf32>
    %cst_41 = arith.constant 5.000000e-01 : f32
    %98 = vector.broadcast %cst_41 : f32 to vector<1x1x32xf32>
    %99 = arith.mulf %98, %97 : vector<1x1x32xf32>
    %100 = vector.broadcast %99 : vector<1x1x32xf32> to vector<1x16x32xf32>
    %101 = arith.mulf %72, %100 : vector<1x16x32xf32>
    %cst_42 = arith.constant dense<0xFF800000> : vector<1x32xf32>
    %102 = vector.multi_reduction <maximumf>, %101, %cst_42 [1] : vector<1x16x32xf32> to vector<1x32xf32>
    %103 = vector.shape_cast %102 : vector<1x32xf32> to vector<1x1x32xf32>
    %104 = vector.broadcast %103 : vector<1x1x32xf32> to vector<1x16x32xf32>
    %105 = arith.subf %101, %104 : vector<1x16x32xf32>
    %106 = math.exp %105 : vector<1x16x32xf32>
    %cst_43 = arith.constant dense<0.000000e+00> : vector<1x32xf32>
    %107 = vector.multi_reduction <add>, %106, %cst_43 [1] : vector<1x16x32xf32> to vector<1x32xf32>
    %108 = vector.shape_cast %107 : vector<1x32xf32> to vector<1x1x32xf32>
    %109 = tpu.reciprocal %108 {approx = true} : vector<1x1x32xf32> -> vector<1x1x32xf32>
    %110 = vector.broadcast %109 : vector<1x1x32xf32> to vector<1x16x32xf32>
    %111 = arith.mulf %106, %110 : vector<1x16x32xf32>
    %112 = vector.extract_strided_slice %6 {offsets = [0, 4], sizes = [8, 16], strides = [1, 1]} : vector<8x20xf32> to vector<8x16xf32>
    %113 = vector.shape_cast %112 : vector<8x16xf32> to vector<1x8x16xf32>
    "tpu.trace_start"() <{level = 10 : i32, message = "bik,bkj->bij"}> : () -> ()
    %cst_44 = arith.constant dense<0.000000e+00> : vector<1x8x32xf32>
    %114 = tpu.matmul %113, %111, %cst_44 {dimension_numbers = #tpu.dot_dimension_numbers<[2], [1], [1], [2], [0, 0, 0, 1, 1, 2], [0], [0]>} : vector<1x8x16xf32>, vector<1x16x32xf32>, vector<1x8x32xf32> -> vector<1x8x32xf32>
    "tpu.trace_stop"() : () -> ()
    %115 = arith.addf %62, %114 : vector<1x8x32xf32>
    %cst_45 = arith.constant dense<0.000000e+00> : vector<1x8xf32>
    %116 = vector.multi_reduction <add>, %115, %cst_45 [2] : vector<1x8x32xf32> to vector<1x8xf32>
    %117 = vector.shape_cast %116 : vector<1x8xf32> to vector<1x8x1xf32>
    %cst_46 = arith.constant 3.200000e+01 : f32
    %118 = vector.broadcast %cst_46 : f32 to vector<1x8x1xf32>
    %119 = arith.divf %117, %118 : vector<1x8x1xf32>
    %c64_47 = arith.constant 64 : index
    %c0_48 = arith.constant 0 : index
    %120 = vector.load %arg2[%c64_47, %c0_48] : memref<120x128xf32, #tpu.memory_space<vmem>>, vector<8x128xf32>
    %121 = vector.extract_strided_slice %120 {offsets = [0, 97], sizes = [8, 2], strides = [1, 1]} : vector<8x128xf32> to vector<8x2xf32>
    %122 = vector.shape_cast %121 : vector<8x2xf32> to vector<1x8x2xf32>
    %123 = vector.broadcast %119 : vector<1x8x1xf32> to vector<1x8x2xf32>
    %124 = arith.mulf %123, %122 : vector<1x8x2xf32>
    %cst_49 = arith.constant dense<0.000000e+00> : vector<1x2xf32>
    %125 = vector.multi_reduction <add>, %124, %cst_49 [1] : vector<1x8x2xf32> to vector<1x2xf32>
    %126 = vector.shape_cast %125 : vector<1x2xf32> to vector<1x1x2xf32>
    %c64_50 = arith.constant 64 : index
    %c0_51 = arith.constant 0 : index
    %127 = vector.load %arg2[%c64_50, %c0_51] : memref<120x128xf32, #tpu.memory_space<vmem>>, vector<1x128xf32>
    %128 = vector.extract_strided_slice %127 {offsets = [0, 117], sizes = [1, 2], strides = [1, 1]} : vector<1x128xf32> to vector<1x2xf32>
    %129 = vector.shape_cast %128 : vector<1x2xf32> to vector<1x1x2xf32>
    %130 = arith.addf %126, %129 : vector<1x1x2xf32>
    %cst_52 = arith.constant 5.000000e-01 : f32
    %131 = vector.broadcast %cst_52 : f32 to vector<1x1x2xf32>
    %132 = arith.mulf %131, %130 : vector<1x1x2xf32>
    %cst_53 = arith.constant 0.707106769 : f32
    %133 = vector.broadcast %cst_53 : f32 to vector<1x1x2xf32>
    %134 = arith.mulf %130, %133 : vector<1x1x2xf32>
    %cst_54 = arith.constant 0.000000e+00 : f32
    %135 = vector.broadcast %cst_54 : f32 to vector<1x1x2xf32>
    %136 = arith.cmpf oge, %134, %135 : vector<1x1x2xf32>
    %cst_55 = arith.constant 1.000000e+00 : f32
    %cst_56 = arith.constant -1.000000e+00 : f32
    %137 = vector.broadcast %cst_55 : f32 to vector<1x1x2xf32>
    %138 = vector.broadcast %cst_56 : f32 to vector<1x1x2xf32>
    %139 = arith.select %136, %137, %138 : vector<1x1x2xi1>, vector<1x1x2xf32>
    %140 = math.absf %134 : vector<1x1x2xf32>
    %cst_57 = arith.constant 0.327591091 : f32
    %141 = vector.broadcast %cst_57 : f32 to vector<1x1x2xf32>
    %142 = arith.mulf %141, %140 : vector<1x1x2xf32>
    %cst_58 = arith.constant 1.000000e+00 : f32
    %143 = vector.broadcast %cst_58 : f32 to vector<1x1x2xf32>
    %144 = arith.addf %143, %142 : vector<1x1x2xf32>
    %cst_59 = arith.constant 1.000000e+00 : f32
    %145 = vector.broadcast %cst_59 : f32 to vector<1x1x2xf32>
    %146 = arith.divf %145, %144 : vector<1x1x2xf32>
    %cst_60 = arith.constant 1.06140542 : f32
    %147 = vector.broadcast %cst_60 : f32 to vector<1x1x2xf32>
    %148 = arith.mulf %147, %146 : vector<1x1x2xf32>
    %cst_61 = arith.constant -1.45315206 : f32
    %149 = vector.broadcast %cst_61 : f32 to vector<1x1x2xf32>
    %150 = arith.addf %148, %149 : vector<1x1x2xf32>
    %151 = arith.mulf %150, %146 : vector<1x1x2xf32>
    %cst_62 = arith.constant 1.42141378 : f32
    %152 = vector.broadcast %cst_62 : f32 to vector<1x1x2xf32>
    %153 = arith.addf %151, %152 : vector<1x1x2xf32>
    %154 = arith.mulf %153, %146 : vector<1x1x2xf32>
    %cst_63 = arith.constant -0.284496725 : f32
    %155 = vector.broadcast %cst_63 : f32 to vector<1x1x2xf32>
    %156 = arith.addf %154, %155 : vector<1x1x2xf32>
    %157 = arith.mulf %156, %146 : vector<1x1x2xf32>
    %cst_64 = arith.constant 0.254829586 : f32
    %158 = vector.broadcast %cst_64 : f32 to vector<1x1x2xf32>
    %159 = arith.addf %157, %158 : vector<1x1x2xf32>
    %160 = arith.mulf %159, %146 : vector<1x1x2xf32>
    %cst_65 = arith.constant 0.000000e+00 : f32
    %161 = vector.broadcast %cst_65 : f32 to vector<1x1x2xf32>
    %162 = arith.subf %161, %140 : vector<1x1x2xf32>
    %163 = arith.mulf %162, %140 : vector<1x1x2xf32>
    %164 = math.exp %163 : vector<1x1x2xf32>
    %165 = arith.mulf %160, %164 : vector<1x1x2xf32>
    %cst_66 = arith.constant 1.000000e+00 : f32
    %166 = vector.broadcast %cst_66 : f32 to vector<1x1x2xf32>
    %167 = arith.subf %166, %165 : vector<1x1x2xf32>
    %168 = arith.mulf %139, %167 : vector<1x1x2xf32>
    %cst_67 = arith.constant 1.000000e+00 : f32
    %169 = vector.broadcast %cst_67 : f32 to vector<1x1x2xf32>
    %170 = arith.addf %169, %168 : vector<1x1x2xf32>
    %171 = arith.mulf %132, %170 : vector<1x1x2xf32>
    %c64_68 = arith.constant 64 : index
    %c0_69 = arith.constant 0 : index
    %172 = vector.load %arg2[%c64_68, %c0_69] : memref<120x128xf32, #tpu.memory_space<vmem>>, vector<8x128xf32>
    %173 = vector.extract_strided_slice %172 {offsets = [0, 99], sizes = [8, 2], strides = [1, 1]} : vector<8x128xf32> to vector<8x2xf32>
    %174 = vector.shape_cast %173 : vector<8x2xf32> to vector<1x8x2xf32>
    %175 = vector.broadcast %171 : vector<1x1x2xf32> to vector<1x8x2xf32>
    %176 = arith.mulf %175, %174 : vector<1x8x2xf32>
    %cst_70 = arith.constant dense<0.000000e+00> : vector<1x8xf32>
    %177 = vector.multi_reduction <add>, %176, %cst_70 [2] : vector<1x8x2xf32> to vector<1x8xf32>
    %178 = vector.shape_cast %177 : vector<1x8xf32> to vector<1x8x1xf32>
    %c64_71 = arith.constant 64 : index
    %c0_72 = arith.constant 0 : index
    %179 = vector.load %arg2[%c64_71, %c0_72] : memref<120x128xf32, #tpu.memory_space<vmem>>, vector<8x128xf32>
    %180 = vector.extract_strided_slice %179 {offsets = [0, 103], sizes = [8, 1], strides = [1, 1]} : vector<8x128xf32> to vector<8x1xf32>
    %181 = vector.shape_cast %180 : vector<8x1xf32> to vector<1x8x1xf32>
    %182 = arith.addf %178, %181 : vector<1x8x1xf32>
    %c64_73 = arith.constant 64 : index
    %c0_74 = arith.constant 0 : index
    %183 = vector.load %arg2[%c64_73, %c0_74] : memref<120x128xf32, #tpu.memory_space<vmem>>, vector<8x128xf32>
    %184 = vector.extract_strided_slice %183 {offsets = [0, 101], sizes = [8, 2], strides = [1, 1]} : vector<8x128xf32> to vector<8x2xf32>
    %185 = vector.shape_cast %184 : vector<8x2xf32> to vector<1x8x2xf32>
    %186 = vector.broadcast %171 : vector<1x1x2xf32> to vector<1x8x2xf32>
    %187 = arith.mulf %186, %185 : vector<1x8x2xf32>
    %cst_75 = arith.constant dense<0.000000e+00> : vector<1x8xf32>
    %188 = vector.multi_reduction <add>, %187, %cst_75 [2] : vector<1x8x2xf32> to vector<1x8xf32>
    %189 = vector.shape_cast %188 : vector<1x8xf32> to vector<1x8x1xf32>
    %c64_76 = arith.constant 64 : index
    %c0_77 = arith.constant 0 : index
    %190 = vector.load %arg2[%c64_76, %c0_77] : memref<120x128xf32, #tpu.memory_space<vmem>>, vector<8x128xf32>
    %191 = vector.extract_strided_slice %190 {offsets = [0, 104], sizes = [8, 1], strides = [1, 1]} : vector<8x128xf32> to vector<8x1xf32>
    %192 = vector.shape_cast %191 : vector<8x1xf32> to vector<1x8x1xf32>
    %193 = arith.addf %189, %192 : vector<1x8x1xf32>
    %194 = arith.maximumf %182, %193 : vector<1x8x1xf32>
    %195 = arith.subf %182, %194 : vector<1x8x1xf32>
    %196 = math.exp %195 : vector<1x8x1xf32>
    %197 = arith.subf %193, %194 : vector<1x8x1xf32>
    %198 = math.exp %197 : vector<1x8x1xf32>
    %199 = arith.addf %196, %198 : vector<1x8x1xf32>
    %cst_78 = arith.constant 1.000000e+00 : f32
    %200 = vector.broadcast %cst_78 : f32 to vector<1x8x1xf32>
    %201 = arith.divf %200, %199 : vector<1x8x1xf32>
    %202 = arith.mulf %196, %201 : vector<1x8x1xf32>
    %203 = vector.broadcast %202 : vector<1x8x1xf32> to vector<1x8x32xf32>
    %204 = arith.mulf %62, %203 : vector<1x8x32xf32>
    %205 = arith.mulf %198, %201 : vector<1x8x1xf32>
    %206 = vector.broadcast %205 : vector<1x8x1xf32> to vector<1x8x32xf32>
    %207 = arith.mulf %114, %206 : vector<1x8x32xf32>
    %208 = arith.addf %204, %207 : vector<1x8x32xf32>
    %209 = vector.shape_cast %208 : vector<1x8x32xf32> to vector<8x32xf32>
    %c0_79 = arith.constant 0 : index
    %c0_80 = arith.constant 0 : index
    %210 = vector.load %arg2[%c0_79, %c0_80] : memref<120x128xf32, #tpu.memory_space<vmem>>, vector<32x128xf32>
    %211 = vector.extract_strided_slice %210 {offsets = [0, 96], sizes = [32, 32], strides = [1, 1]} : vector<32x128xf32> to vector<32x32xf32>
    %cst_81 = arith.constant dense<0.000000e+00> : vector<8x32xf32>
    %212 = tpu.matmul %209, %211, %cst_81 {dimension_numbers = #tpu.dot_dimension_numbers<[1], [0], [0], [1], [0, 0, 1, 1], [], []>} : vector<8x32xf32>, vector<32x32xf32>, vector<8x32xf32> -> vector<8x32xf32>
    %c96 = arith.constant 96 : index
    %c0_82 = arith.constant 0 : index
    %213 = vector.load %arg2[%c96, %c0_82] : memref<120x128xf32, #tpu.memory_space<vmem>>, vector<1x128xf32>
    %214 = vector.extract_strided_slice %213 {offsets = [0, 64], sizes = [1, 32], strides = [1, 1]} : vector<1x128xf32> to vector<1x32xf32>
    %215 = vector.broadcast %214 : vector<1x32xf32> to vector<8x32xf32>
    %216 = arith.addf %212, %215 : vector<8x32xf32>
    %217 = arith.addf %1, %216 : vector<8x32xf32>
    %c104 = arith.constant 104 : index
    %c0_83 = arith.constant 0 : index
    %218 = vector.load %arg2[%c104, %c0_83] : memref<120x128xf32, #tpu.memory_space<vmem>>, vector<1x32xf32>
    %c104_84 = arith.constant 104 : index
    %c0_85 = arith.constant 0 : index
    %219 = vector.load %arg2[%c104_84, %c0_85] : memref<120x128xf32, #tpu.memory_space<vmem>>, vector<1x128xf32>
    %220 = vector.extract_strided_slice %219 {offsets = [0, 32], sizes = [1, 32], strides = [1, 1]} : vector<1x128xf32> to vector<1x32xf32>
    %cst_86 = arith.constant dense<0.000000e+00> : vector<8xf32>
    %221 = vector.multi_reduction <add>, %217, %cst_86 [1] : vector<8x32xf32> to vector<8xf32>
    %222 = vector.shape_cast %221 : vector<8xf32> to vector<8x1xf32>
    %cst_87 = arith.constant 3.200000e+01 : f32
    %223 = vector.broadcast %cst_87 : f32 to vector<8x1xf32>
    %224 = arith.divf %222, %223 : vector<8x1xf32>
    %225 = vector.broadcast %224 : vector<8x1xf32> to vector<8x32xf32>
    %226 = arith.subf %217, %225 : vector<8x32xf32>
    %227 = arith.mulf %226, %226 : vector<8x32xf32>
    %cst_88 = arith.constant dense<0.000000e+00> : vector<8xf32>
    %228 = vector.multi_reduction <add>, %227, %cst_88 [1] : vector<8x32xf32> to vector<8xf32>
    %229 = vector.shape_cast %228 : vector<8xf32> to vector<8x1xf32>
    %cst_89 = arith.constant 3.200000e+01 : f32
    %230 = vector.broadcast %cst_89 : f32 to vector<8x1xf32>
    %231 = arith.divf %229, %230 : vector<8x1xf32>
    %232 = vector.broadcast %224 : vector<8x1xf32> to vector<8x32xf32>
    %233 = arith.subf %217, %232 : vector<8x32xf32>
    %cst_90 = arith.constant 9.99999974E-6 : f32
    %234 = vector.broadcast %cst_90 : f32 to vector<8x1xf32>
    %235 = arith.addf %231, %234 : vector<8x1xf32>
    %236 = math.rsqrt %235 : vector<8x1xf32>
    %237 = vector.broadcast %236 : vector<8x1xf32> to vector<8x32xf32>
    %238 = arith.mulf %233, %237 : vector<8x32xf32>
    %239 = vector.broadcast %218 : vector<1x32xf32> to vector<8x32xf32>
    %240 = arith.mulf %238, %239 : vector<8x32xf32>
    %241 = vector.broadcast %220 : vector<1x32xf32> to vector<8x32xf32>
    %242 = arith.addf %240, %241 : vector<8x32xf32>
    %c0_91 = arith.constant 0 : index
    %c0_92 = arith.constant 0 : index
    %243 = vector.load %arg2[%c0_91, %c0_92] : memref<120x128xf32, #tpu.memory_space<vmem>>, vector<32x128xf32>
    %244 = vector.extract_strided_slice %243 {offsets = [0, 32], sizes = [32, 64], strides = [1, 1]} : vector<32x128xf32> to vector<32x64xf32>
    %cst_93 = arith.constant dense<0.000000e+00> : vector<8x64xf32>
    %245 = tpu.matmul %242, %244, %cst_93 {dimension_numbers = #tpu.dot_dimension_numbers<[1], [0], [0], [1], [0, 0, 1, 1], [], []>} : vector<8x32xf32>, vector<32x64xf32>, vector<8x64xf32> -> vector<8x64xf32>
    %c96_94 = arith.constant 96 : index
    %c0_95 = arith.constant 0 : index
    %246 = vector.load %arg2[%c96_94, %c0_95] : memref<120x128xf32, #tpu.memory_space<vmem>>, vector<1x64xf32>
    %247 = vector.broadcast %246 : vector<1x64xf32> to vector<8x64xf32>
    %248 = arith.addf %245, %247 : vector<8x64xf32>
    %cst_96 = arith.constant 5.000000e-01 : f32
    %249 = vector.broadcast %cst_96 : f32 to vector<8x64xf32>
    %250 = arith.mulf %249, %248 : vector<8x64xf32>
    %cst_97 = arith.constant 0.707106769 : f32
    %251 = vector.broadcast %cst_97 : f32 to vector<8x64xf32>
    %252 = arith.mulf %248, %251 : vector<8x64xf32>
    %cst_98 = arith.constant 0.000000e+00 : f32
    %253 = vector.broadcast %cst_98 : f32 to vector<8x64xf32>
    %254 = arith.cmpf oge, %252, %253 : vector<8x64xf32>
    %cst_99 = arith.constant 1.000000e+00 : f32
    %cst_100 = arith.constant -1.000000e+00 : f32
    %255 = vector.broadcast %cst_99 : f32 to vector<8x64xf32>
    %256 = vector.broadcast %cst_100 : f32 to vector<8x64xf32>
    %257 = arith.select %254, %255, %256 : vector<8x64xi1>, vector<8x64xf32>
    %258 = math.absf %252 : vector<8x64xf32>
    %cst_101 = arith.constant 0.327591091 : f32
    %259 = vector.broadcast %cst_101 : f32 to vector<8x64xf32>
    %260 = arith.mulf %259, %258 : vector<8x64xf32>
    %cst_102 = arith.constant 1.000000e+00 : f32
    %261 = vector.broadcast %cst_102 : f32 to vector<8x64xf32>
    %262 = arith.addf %261, %260 : vector<8x64xf32>
    %cst_103 = arith.constant 1.000000e+00 : f32
    %263 = vector.broadcast %cst_103 : f32 to vector<8x64xf32>
    %264 = arith.divf %263, %262 : vector<8x64xf32>
    %cst_104 = arith.constant 1.06140542 : f32
    %265 = vector.broadcast %cst_104 : f32 to vector<8x64xf32>
    %266 = arith.mulf %265, %264 : vector<8x64xf32>
    %cst_105 = arith.constant -1.45315206 : f32
    %267 = vector.broadcast %cst_105 : f32 to vector<8x64xf32>
    %268 = arith.addf %266, %267 : vector<8x64xf32>
    %269 = arith.mulf %268, %264 : vector<8x64xf32>
    %cst_106 = arith.constant 1.42141378 : f32
    %270 = vector.broadcast %cst_106 : f32 to vector<8x64xf32>
    %271 = arith.addf %269, %270 : vector<8x64xf32>
    %272 = arith.mulf %271, %264 : vector<8x64xf32>
    %cst_107 = arith.constant -0.284496725 : f32
    %273 = vector.broadcast %cst_107 : f32 to vector<8x64xf32>
    %274 = arith.addf %272, %273 : vector<8x64xf32>
    %275 = arith.mulf %274, %264 : vector<8x64xf32>
    %cst_108 = arith.constant 0.254829586 : f32
    %276 = vector.broadcast %cst_108 : f32 to vector<8x64xf32>
    %277 = arith.addf %275, %276 : vector<8x64xf32>
    %278 = arith.mulf %277, %264 : vector<8x64xf32>
    %cst_109 = arith.constant 0.000000e+00 : f32
    %279 = vector.broadcast %cst_109 : f32 to vector<8x64xf32>
    %280 = arith.subf %279, %258 : vector<8x64xf32>
    %281 = arith.mulf %280, %258 : vector<8x64xf32>
    %282 = math.exp %281 : vector<8x64xf32>
    %283 = arith.mulf %278, %282 : vector<8x64xf32>
    %cst_110 = arith.constant 1.000000e+00 : f32
    %284 = vector.broadcast %cst_110 : f32 to vector<8x64xf32>
    %285 = arith.subf %284, %283 : vector<8x64xf32>
    %286 = arith.mulf %257, %285 : vector<8x64xf32>
    %cst_111 = arith.constant 1.000000e+00 : f32
    %287 = vector.broadcast %cst_111 : f32 to vector<8x64xf32>
    %288 = arith.addf %287, %286 : vector<8x64xf32>
    %289 = arith.mulf %250, %288 : vector<8x64xf32>
    %c0_112 = arith.constant 0 : index
    %c0_113 = arith.constant 0 : index
    %290 = vector.load %arg2[%c0_112, %c0_113] : memref<120x128xf32, #tpu.memory_space<vmem>>, vector<64x32xf32>
    %cst_114 = arith.constant dense<0.000000e+00> : vector<8x32xf32>
    %291 = tpu.matmul %289, %290, %cst_114 {dimension_numbers = #tpu.dot_dimension_numbers<[1], [0], [0], [1], [0, 0, 1, 1], [], []>} : vector<8x64xf32>, vector<64x32xf32>, vector<8x32xf32> -> vector<8x32xf32>
    %c96_115 = arith.constant 96 : index
    %c0_116 = arith.constant 0 : index
    %292 = vector.load %arg2[%c96_115, %c0_116] : memref<120x128xf32, #tpu.memory_space<vmem>>, vector<1x128xf32>
    %293 = vector.extract_strided_slice %292 {offsets = [0, 96], sizes = [1, 32], strides = [1, 1]} : vector<1x128xf32> to vector<1x32xf32>
    %294 = vector.broadcast %293 : vector<1x32xf32> to vector<8x32xf32>
    %295 = arith.addf %291, %294 : vector<8x32xf32>
    %296 = arith.addf %242, %295 : vector<8x32xf32>
    %c104_117 = arith.constant 104 : index
    %c0_118 = arith.constant 0 : index
    %297 = vector.load %arg2[%c104_117, %c0_118] : memref<120x128xf32, #tpu.memory_space<vmem>>, vector<1x128xf32>
    %298 = vector.extract_strided_slice %297 {offsets = [0, 64], sizes = [1, 32], strides = [1, 1]} : vector<1x128xf32> to vector<1x32xf32>
    %c104_119 = arith.constant 104 : index
    %c0_120 = arith.constant 0 : index
    %299 = vector.load %arg2[%c104_119, %c0_120] : memref<120x128xf32, #tpu.memory_space<vmem>>, vector<1x128xf32>
    %300 = vector.extract_strided_slice %299 {offsets = [0, 96], sizes = [1, 32], strides = [1, 1]} : vector<1x128xf32> to vector<1x32xf32>
    %cst_121 = arith.constant dense<0.000000e+00> : vector<8xf32>
    %301 = vector.multi_reduction <add>, %296, %cst_121 [1] : vector<8x32xf32> to vector<8xf32>
    %302 = vector.shape_cast %301 : vector<8xf32> to vector<8x1xf32>
    %cst_122 = arith.constant 3.200000e+01 : f32
    %303 = vector.broadcast %cst_122 : f32 to vector<8x1xf32>
    %304 = arith.divf %302, %303 : vector<8x1xf32>
    %305 = vector.broadcast %304 : vector<8x1xf32> to vector<8x32xf32>
    %306 = arith.subf %296, %305 : vector<8x32xf32>
    %307 = arith.mulf %306, %306 : vector<8x32xf32>
    %cst_123 = arith.constant dense<0.000000e+00> : vector<8xf32>
    %308 = vector.multi_reduction <add>, %307, %cst_123 [1] : vector<8x32xf32> to vector<8xf32>
    %309 = vector.shape_cast %308 : vector<8xf32> to vector<8x1xf32>
    %cst_124 = arith.constant 3.200000e+01 : f32
    %310 = vector.broadcast %cst_124 : f32 to vector<8x1xf32>
    %311 = arith.divf %309, %310 : vector<8x1xf32>
    %312 = vector.broadcast %304 : vector<8x1xf32> to vector<8x32xf32>
    %313 = arith.subf %296, %312 : vector<8x32xf32>
    %cst_125 = arith.constant 9.99999974E-6 : f32
    %314 = vector.broadcast %cst_125 : f32 to vector<8x1xf32>
    %315 = arith.addf %311, %314 : vector<8x1xf32>
    %316 = math.rsqrt %315 : vector<8x1xf32>
    %317 = vector.broadcast %316 : vector<8x1xf32> to vector<8x32xf32>
    %318 = arith.mulf %313, %317 : vector<8x32xf32>
    %319 = vector.broadcast %298 : vector<1x32xf32> to vector<8x32xf32>
    %320 = arith.mulf %318, %319 : vector<8x32xf32>
    %321 = vector.broadcast %300 : vector<1x32xf32> to vector<8x32xf32>
    %322 = arith.addf %320, %321 : vector<8x32xf32>
    %323 = vector.shape_cast %322 : vector<8x32xf32> to vector<1x8x32xf32>
    %c0_126 = arith.constant 0 : index
    %c0_127 = arith.constant 0 : index
    %c0_128 = arith.constant 0 : index
    %324 = vector.load %arg3[%c0_126, %c0_127, %c0_128] : memref<1x8x32xf32, #tpu.memory_space<vmem>>, vector<1x8x32xf32>
    tpu.vector_store %arg3[%c0_126, %c0_127, %c0_128], %323 {strides = array<i32>} : memref<1x8x32xf32, #tpu.memory_space<vmem>>, vector<1x8x32xf32>,
    return
  }
  func.func @transform_0(%arg0: i32) -> (i32, i32, i32) {
    %c0_i32 = arith.constant 0 : i32
    %c0_i32_0 = arith.constant 0 : i32
    %c0_i32_1 = arith.constant 0 : i32
    return %arg0, %c0_i32, %c0_i32_0 : i32, i32, i32
  }
  func.func @transform_1(%arg0: i32) -> (i32, i32) {
    %c0_i32 = arith.constant 0 : i32
    %c0_i32_0 = arith.constant 0 : i32
    %c0_i32_1 = arith.constant 0 : i32
    return %c0_i32, %c0_i32_0 : i32, i32
  }
  func.func @transform_2(%arg0: i32) -> (i32, i32, i32) {
    %c0_i32 = arith.constant 0 : i32
    %c0_i32_0 = arith.constant 0 : i32
    %c0_i32_1 = arith.constant 0 : i32
    return %arg0, %c0_i32, %c0_i32_0 : i32, i32, i32
  }
}

</mosaic_0001>

<llo_original>
// kernel: tpu_custom_call.1
$region0: #{tpu_custom_call.1}
  #allocation0 [shape = 'u32[]', space=smem, size = 0x4, offset = 0x4, fixed_abs, tag = 'smem constant byte address 0x4 - core index']
  #allocation1 [shape = 'u32[144,128]{1,0:T(1,128)}', space=vmem, size = 0x12000, scoped, tag = 'internal scratch']
  %s0 = inlined_call_operand.hbm [shape: f32[2,8,32], index: 0, kind: input, shape index: {}]
  %s1 = inlined_call_operand.hbm [shape: f32[120,128], index: 1, kind: input, shape index: {}]
  %s2 = inlined_call_operand.hbm [shape: f32[2,8,32], index: 2, kind: output, shape index: {}]
  %s3 = sld [smem:[#allocation0]]
  $region49: #{tpu_custom_call.1} parent=0
    _
  %s5 = ssub.s32 1, %s3
  %s6 = scalar_select 0, %s5, %s3
  $region1: #{tpu_custom_call.1} parent=0
    #allocation2 [shape = 'u8[8192]{0}', space=vmem, size = 0x2000, scoped, tag = 'input window, operand 0']
    #allocation3 [shape = 's32[2]{0}', space=sflag, size = 0x8, scoped, tag = 'scoped memory for tpu_custom_call.1']
    #allocation4 [shape = 's32[2]{0}', space=sflag, size = 0x8, scoped, tag = 'scoped memory for tpu_custom_call.1']
    #allocation5 [shape = 'u8[61440]{0}', space=vmem, size = 0xf000, scoped, tag = 'input window, operand 1, single buffered']
    #allocation6 [shape = 's32[1]{0}', space=sflag, size = 0x4, scoped, tag = 'scoped memory for tpu_custom_call.1']
    #allocation7 [shape = 'u8[8192]{0}', space=vmem, size = 0x2000, scoped, tag = 'output window, operand 0']
    %7 = vsyncpa [#allocation3], 0
    %s8 = scalar_lea.sflag [#allocation3], 1
    %9 = vsyncpa %s8, 0
    %10 = vsyncpa [#allocation6], 0
    %11 = vsyncpa [#allocation4], 0
    %s12 = scalar_lea.sflag [#allocation4], 1
    %13 = vsyncpa %s12, 0
    loop: start=0, step=1, limit=4
    $region2: #{tpu_custom_call.1} parent=1 // loop_pre_header
      _
    $region3: #{tpu_custom_call.1} parent=1 // loop_header
      %s15 = sphi 0, %s19
      %p16 = scmp.ge.s32.totalorder %s15, 4
      %s25 = sphi 0, %s27
      %s28 = sphi 0, %s25
      %s29 = sphi 0, %s28
      %s45 = sphi 0, %s29
      %s49 = sphi 0, %s49
      %s51 = sphi 0, %s49
      %s52 = sphi 0, %s51
      %s66 = sphi 0, %s52
      %s72 = sphi 0, %s74
      %s75 = sphi 0, %s72
      %s76 = sphi 0, %s75
      %s92 = sphi 0, %s76
    $region4: #{tpu_custom_call.1} parent=1 // loop_header_branch
      %18 = sbr.rel (%p16) target = $region8
    $region5: #{tpu_custom_call.1} parent=1 // loop_body
      %s20 = ssub.s32 %s15, 1
      %s21 = ssub.s32 %s15, 2
      %s22 = sadd.s32 %s15, 1
      %s23 = ssub.s32 %s15, %s22
      %p24 = scmp.eq.s32.totalorder %s23, 0
      %s26 = sadd.s32 %s25, 1
      %s27 = scalar_select %p24, %s25, %s26
      %p30 = pneg %p24
      %p31 = scmp.eq.s32.totalorder %s15, 1
      %p32 = por %p30, %p31
      %p33 = scmp.ne.s32.totalorder %s25, %s28
      %p34 = scmp.eq.s32.totalorder %s15, 0
      %p35 = por %p33, %p34
      %p36 = scmp.ne.s32.totalorder %s25, %s28
      %p37 = scmp.eq.s32.totalorder %s20, 1
      %p38 = por %p36, %p37
      %p39 = scmp.ne.s32.totalorder %s28, %s29
      %p40 = scmp.eq.s32.totalorder %s20, 0
      %p41 = por %p39, %p40
      %p42 = scmp.ne.s32.totalorder %s28, %s29
      %p43 = scmp.eq.s32.totalorder %s21, 1
      %p44 = por %p42, %p43
      %p46 = scmp.ne.s32.totalorder %s29, %s45
      %p47 = scmp.eq.s32.totalorder %s21, 0
      %p48 = por %p46, %p47
      %s50 = sadd.s32 %s49, 1
      %p53 = scmp.eq.s32.totalorder %s15, 1
      %p54 = scmp.ne.s32.totalorder %s49, %s51
      %p55 = scmp.eq.s32.totalorder %s15, 0
      %p56 = por %p54, %p55
      %p57 = scmp.ne.s32.totalorder %s49, %s51
      %p58 = scmp.eq.s32.totalorder %s20, 1
      %p59 = por %p57, %p58
      %p60 = scmp.ne.s32.totalorder %s51, %s52
      %p61 = scmp.eq.s32.totalorder %s20, 0
      %p62 = por %p60, %p61
      %p63 = scmp.ne.s32.totalorder %s51, %s52
      %p64 = scmp.eq.s32.totalorder %s21, 1
      %p65 = por %p63, %p64
      %p67 = scmp.ne.s32.totalorder %s52, %s66
      %p68 = scmp.eq.s32.totalorder %s21, 0
      %p69 = por %p67, %p68
      %s70 = ssub.s32 %s15, %s22
      %p71 = scmp.eq.s32.totalorder %s70, 0
      %s73 = sadd.s32 %s72, 1
      %s74 = scalar_select %p71, %s72, %s73
      %p77 = pneg %p71
      %p78 = scmp.eq.s32.totalorder %s15, 1
      %p79 = por %p77, %p78
      %p80 = scmp.ne.s32.totalorder %s72, %s75
      %p81 = scmp.eq.s32.totalorder %s15, 0
      %p82 = por %p80, %p81
      %p83 = scmp.ne.s32.totalorder %s72, %s75
      %p84 = scmp.eq.s32.totalorder %s20, 1
      %p85 = por %p83, %p84
      %p86 = scmp.ne.s32.totalorder %s75, %s76
      %p87 = scmp.eq.s32.totalorder %s20, 0
      %p88 = por %p86, %p87
      %p89 = scmp.ne.s32.totalorder %s75, %s76
      %p90 = scmp.eq.s32.totalorder %s21, 1
      %p91 = por %p89, %p90
      %p93 = scmp.ne.s32.totalorder %s76, %s92
      %p94 = scmp.eq.s32.totalorder %s21, 0
      %p95 = por %p93, %p94
      %p96 = scmp.le.s32.totalorder 1, %s15
      %p97 = scmp.lt.s32.totalorder %s15, 3
      %p98 = pnand %p96, %p97
      %p99 = pneg %p98
      // Predicated region
      $region9: #{tpu_custom_call.1} parent=5 // pred_check
        _
      $region10: #{tpu_custom_call.1} parent=5 // pred_check_branch
        %101 = sbr.rel (%p98) target = $region12
      $region11: #{tpu_custom_call.1} parent=5 // pred_region
        %s102 = ssub.s32 %s15, 1
        // Predicated region
        $region13: #{tpu_custom_call.1} parent=11 // pred_check
          %p103 = pneg %p62
        $region14: #{tpu_custom_call.1} parent=11 // pred_check_branch
          %105 = sbr.rel (%p103) target = $region16
        $region15: #{tpu_custom_call.1} parent=11 // pred_region
          %s107 = ssub.s32 1920, 1920
          %108 = vsyncadd [#allocation6], %s107
          %s109 = sshll.u32 [#allocation5], 4
          %s110 = int_to_ptr.vmem [resolvable:$true] %s109
          %115 = dma.hbm_to_vmem [thread:$0]  %s1, 1920, %s110, [#allocation6], 128, 128, 8
        $region16: #{tpu_custom_call.1} parent=11 // pred_fallthru
          _
      $region12: #{tpu_custom_call.1} parent=5 // pred_fallthru
        _
      %p116 = scmp.lt.s32.totalorder %s15, 2
      // Predicated region
      $region17: #{tpu_custom_call.1} parent=5 // pred_check
        %p117 = pneg %p116
      $region18: #{tpu_custom_call.1} parent=5 // pred_check_branch
        %119 = sbr.rel (%p117) target = $region20
      $region19: #{tpu_custom_call.1} parent=5 // pred_region
        // Predicated region
        $region21: #{tpu_custom_call.1} parent=19 // pred_check
          %p120 = pneg %p35
        $region22: #{tpu_custom_call.1} parent=19 // pred_check_branch
          %122 = sbr.rel (%p120) target = $region24
        $region23: #{tpu_custom_call.1} parent=19 // pred_region
          %s123 = sand.u32 %s25, 1
          %s124 = scalar_lea.sflag [#allocation3], %s123
          %s125 = sand.u32 %s25, 1
          %s126 = smul.addr %s125, 8
          %s127 = scalar_lea.vmem [#allocation2], %s126
          %s129 = ssub.s32 128, 128
          %130 = vsyncadd %s124, %s129
          %s131 = smul.addr %s15, 128
          %s132 = scalar_lea.hbm %s0, %s131
          %s134 = sshll.u32 %s127, 4
          %s135 = int_to_ptr.vmem [resolvable:$true] %s134
          %137 = dma.hbm_to_vmem [thread:$0]  %s132, 128, %s135, %s124
        $region24: #{tpu_custom_call.1} parent=19 // pred_fallthru
          _
      $region20: #{tpu_custom_call.1} parent=5 // pred_fallthru
        _
      %p138 = scmp.le.s32.totalorder 1, %s15
      %p139 = scmp.lt.s32.totalorder %s15, 3
      %p140 = pnand %p138, %p139
      %p141 = pneg %p140
      // Predicated region
      $region25: #{tpu_custom_call.1} parent=5 // pred_check
        _
      $region26: #{tpu_custom_call.1} parent=5 // pred_check_branch
        %143 = sbr.rel (%p140) target = $region28
      $region27: #{tpu_custom_call.1} parent=5 // pred_region
        %s144 = ssub.s32 %s15, 1
        %s145 = sand.u32 %s28, 1
        %s146 = scalar_lea.sflag [#allocation3], %s145
        %s147 = sand.u32 %s28, 1
        %s148 = smul.addr %s147, 8
        %s149 = scalar_lea.vmem [#allocation2], %s148
        // Predicated region
        $region29: #{tpu_custom_call.1} parent=27 // pred_check
          %p150 = pneg %p41
        $region30: #{tpu_custom_call.1} parent=27 // pred_check_branch
          %152 = sbr.rel (%p150) target = $region32
        $region31: #{tpu_custom_call.1} parent=27 // pred_region
          %153 = dma.done %s146, 128
        $region32: #{tpu_custom_call.1} parent=27 // pred_fallthru
          _
        // Predicated region
        $region33: #{tpu_custom_call.1} parent=27 // pred_check
          %p154 = pneg %p62
        $region34: #{tpu_custom_call.1} parent=27 // pred_check_branch
          %156 = sbr.rel (%p154) target = $region36
        $region35: #{tpu_custom_call.1} parent=27 // pred_region
          %157 = dma.done [#allocation6], 1920
        $region36: #{tpu_custom_call.1} parent=27 // pred_fallthru
          _
        %s158 = sand.u32 %s28, 1
        %s159 = scalar_lea.sflag [#allocation3], %s158
        %s160 = sand.u32 %s28, 1
        %s161 = smul.addr %s160, 8
        %s162 = scalar_lea.vmem [#allocation2], %s161
        %p163 = pneg %p41
        %p164 = pneg %p38
        %p165 = pneg %p62
        %p166 = pneg %p59
        %p167 = pneg %p88
        %p168 = pneg %p85
        %s169 = sand.u32 %s75, 1
        %s170 = scalar_lea.sflag [#allocation4], %s169
        %s171 = sand.u32 %s75, 1
        %s172 = smul.addr %s171, 8
        %s173 = scalar_lea.vmem [#allocation7], %s172
        %v174 = vld [vmem:[%s149] sm:$0xff]
        %v175 = vld [vmem:[#allocation5 + $0x40] sm:$0xff]
        %v176 = vld [vmem:[#allocation5 + $0x48] sm:$0xff]
        %v177 = vld [vmem:[#allocation5 + $0x50] sm:$0xff]
        %v178 = vld [vmem:[#allocation5 + $0x58] sm:$0xff]
        %v179 = vld [vmem:[#allocation5 + $0x70] sm:$0x1]
        %v180 = vlaneseq
        %v181 = vshrl.u32 %v180, 7
        %v182 = vsub.s32 0, %v181
        %v183 = vrot.slane %v179, %v182
        %vm184 = vcmask 261120
        %v186 = vsel %vm184, %v174, 0
        %188 = vmatprep.subr.mxu0 0.0
        %189 = vmatpush1.msra.mxu0 %v175
        %190 = vmatprep.subr.mxu0 0.0
        %191 = vmatpush1.msra.mxu0 %v176
        %192 = vmatprep.subr.mxu0 0.0
        %193 = vmatpush1.msra.mxu0 %v177
        %194 = vmatprep.subr.mxu0 0.0
        %195 = vmatpush1.msra.mxu0 %v178
        %196 = vmatprep.subr.mxu0 0.0
        %197 = vmatpush1.msra.mxu0 0.0
        %198 = vmatprep.subr.mxu0 0.0
        %199 = vmatpush1.msra.mxu0 0.0
        %200 = vmatprep.subr.mxu0 0.0
        %201 = vmatpush1.msra.mxu0 0.0
        %202 = vmatprep.subr.mxu0 0.0
        %203 = vmatpush1.msra.mxu0 0.0
        %204 = vmatprep.subr.mxu0 0.0
        %205 = vmatpush1.msra.mxu0 0.0
        %206 = vmatprep.subr.mxu0 0.0
        %207 = vmatpush1.msra.mxu0 0.0
        %208 = vmatprep.subr.mxu0 0.0
        %209 = vmatpush1.msra.mxu0 0.0
        %210 = vmatprep.subr.mxu0 0.0
        %211 = vmatpush1.msra.mxu0 0.0
        %212 = vmatprep.subr.mxu0 0.0
        %213 = vmatpush1.msra.mxu0 0.0
        %214 = vmatprep.subr.mxu0 0.0
        %215 = vmatpush1.msra.mxu0 0.0
        %216 = vmatprep.subr.mxu0 0.0
        %217 = vmatpush1.msra.mxu0 0.0
        %218 = vmatprep.subr.mxu0 0.0
        %219 = vmatpush1.msra.mxu0 0.0
        %220 = vmatprep.subr.mxu0 0.0
        %221 = vmatpush1.msra.mxu0 0.0
        %222 = vmatprep.subr.mxu0 0.0
        %223 = vmatpush1.msra.mxu0 0.0
        %224 = vmatprep.subr.mxu0 0.0
        %225 = vmatpush1.msra.mxu0 0.0
        %226 = vmatprep.subr.mxu0 0.0
        %227 = vmatpush1.msra.mxu0 0.0
        %228 = vmatprep.subr.mxu0 0.0
        %229 = vmatpush1.msra.mxu0 0.0
        %230 = vmatprep.subr.mxu0 0.0
        %231 = vmatpush1.msra.mxu0 0.0
        %232 = vmatprep.subr.mxu0 0.0
        %233 = vmatpush1.msra.mxu0 0.0
        %234 = vmatprep.subr.mxu0 0.0
        %235 = vmatpush1.msra.mxu0 0.0
        %236 = vmatprep.subr.mxu0 0.0
        %237 = vmatpush1.msra.mxu0 0.0
        %238 = vmatprep.subr.mxu0 0.0
        %239 = vmatpush1.msra.mxu0 0.0
        %240 = vmatprep.subr.mxu0 0.0
        %241 = vmatpush1.msra.mxu0 0.0
        %242 = vmatprep.subr.mxu0 0.0
        %243 = vmatpush1.msra.mxu0 0.0
        %244 = vmatprep.subr.mxu0 0.0
        %245 = vmatpush1.msra.mxu0 0.0
        %246 = vmatprep.subr.mxu0 0.0
        %247 = vmatpush1.msra.mxu0 0.0
        %248 = vmatprep.subr.mxu0 0.0
        %249 = vmatpush1.msra.mxu0 0.0
        %250 = vmatprep.subr.mxu0 0.0
        %251 = vmatpush1.msra.mxu0 0.0
        %252 = vmatprep.mubr.f32.mxu0 0.0
        %253 = vmatmul.mubr.f32.gmra.mrb[0].mxu0 %v186
        %v254 = vpop.f32.mrb[0].mxu0
        %v255 = vadd.f32 %v183, %v254
        %v256 = vpop.f32.mrb[0].mxu0
        %257 = vdwg.mxu0
        %vm258 = vcmask 31744
        %v259 = vsel %vm258, %v255, 0.0
        %260 = vadd.xlane.f32.xlu0 %v259
        %v261 = vpop.xlane.xlu0 %260
        %v262 = vrcp.pop 4.0
        %v263 = vmul.f32 %v261, %v262
        %v264 = vld [vmem:[#allocation5 + $0x40] sm:$0xff]
        %v265 = vmul.f32 %v263, %v264
        %vm266 = vcmask 777960
        %v267 = vsel %vm266, %v265, 0.0
        %v268 = vrot.slane %v267, 4
        %v269 = vadd.f32 %v267, %v268
        %v270 = vrot.slane %v269, 2
        %v271 = vadd.f32 %v269, %v270
        %v272 = vrot.slane %v271, 1
        %v273 = vadd.f32 %v271, %v272
        %v274 = vmax.f32 %v273, 0.0
        %276 = vrot.lane.b32.xlu0 %v264, 126
        %v277 = vpop.permute.xlu0 %276
        %v279 = vmul.f32 %v274, %v277
        %281 = vrot.lane.b32.xlu0 %v279, 35
        %v282 = vpop.permute.xlu0 %281
        %vm284 = vcmask 15360
        %v285 = vsel %vm284, %v282, 0.0
        %286 = vadd.xlane.f32.xlu0 %v285
        %v287 = vpop.xlane.xlu0 %286
        %v288 = vmul.f32 %v287, 0.5
        %v289 = vtanh.pop %v288
        %v290 = vadd.f32 %v289, 1.0
        %v291 = vmul.f32 %v290, 0.5
        %v292 = vmul.f32 %v255, %v291
        %v293 = vsel %vm258, %v292, -inf
        %294 = vmax.xlane.f32.xlu0 %v293
        %v295 = vpop.xlane.xlu0 %294
        %v296 = vsub.f32 %v292, %v295
        %v297 = vmul.f32 %v296, 1.442695
        %v298 = vpow.pop %v297
        %v299 = vsel %vm258, %v298, 0.0
        %300 = vadd.xlane.f32.xlu0 %v299
        %v301 = vpop.xlane.xlu0 %300
        %v302 = vrcp.pop %v301
        %v303 = vmul.f32 %v298, %v302
        %v304 = vld [vmem:[#allocation5 + $0x40] sm:$0xf]
        %306 = vrot.lane.b32.xlu0 %v304, 23
        %v307 = vpop.permute.xlu0 %306
        %v309 = vsel %vm258, %v303, 0
        %vm311 = vcmask 1043456
        %v312 = vsel %vm311, %v307, 0
        %314 = vmatprep.subr.mxu0 0.0
        %315 = vmatpush1.msra.mxu0 %v312
        %316 = vmatprep.subr.mxu0 0.0
        %317 = vmatpush1.msra.mxu0 0.0
        %318 = vmatprep.subr.mxu0 0.0
        %319 = vmatpush1.msra.mxu0 0.0
        %320 = vmatprep.subr.mxu0 0.0
        %321 = vmatpush1.msra.mxu0 0.0
        %322 = vmatprep.subr.mxu0 0.0
        %323 = vmatpush1.msra.mxu0 0.0
        %324 = vmatprep.subr.mxu0 0.0
        %325 = vmatpush1.msra.mxu0 0.0
        %326 = vmatprep.subr.mxu0 0.0
        %327 = vmatpush1.msra.mxu0 0.0
        %328 = vmatprep.subr.mxu0 0.0
        %329 = vmatpush1.msra.mxu0 0.0
        %330 = vmatprep.subr.mxu0 0.0
        %331 = vmatpush1.msra.mxu0 0.0
        %332 = vmatprep.subr.mxu0 0.0
        %333 = vmatpush1.msra.mxu0 0.0
        %334 = vmatprep.subr.mxu0 0.0
        %335 = vmatpush1.msra.mxu0 0.0
        %336 = vmatprep.subr.mxu0 0.0
        %337 = vmatpush1.msra.mxu0 0.0
        %338 = vmatprep.subr.mxu0 0.0
        %339 = vmatpush1.msra.mxu0 0.0
        %340 = vmatprep.subr.mxu0 0.0
        %341 = vmatpush1.msra.mxu0 0.0
        %342 = vmatprep.subr.mxu0 0.0
        %343 = vmatpush1.msra.mxu0 0.0
        %344 = vmatprep.subr.mxu0 0.0
        %345 = vmatpush1.msra.mxu0 0.0
        %346 = vmatprep.subr.mxu0 0.0
        %347 = vmatpush1.msra.mxu0 0.0
        %348 = vmatprep.subr.mxu0 0.0
        %349 = vmatpush1.msra.mxu0 0.0
        %350 = vmatprep.subr.mxu0 0.0
        %351 = vmatpush1.msra.mxu0 0.0
        %352 = vmatprep.subr.mxu0 0.0
        %353 = vmatpush1.msra.mxu0 0.0
        %354 = vmatprep.subr.mxu0 0.0
        %355 = vmatpush1.msra.mxu0 0.0
        %356 = vmatprep.subr.mxu0 0.0
        %357 = vmatpush1.msra.mxu0 0.0
        %358 = vmatprep.subr.mxu0 0.0
        %359 = vmatpush1.msra.mxu0 0.0
        %360 = vmatprep.subr.mxu0 0.0
        %361 = vmatpush1.msra.mxu0 0.0
        %362 = vmatprep.subr.mxu0 0.0
        %363 = vmatpush1.msra.mxu0 0.0
        %364 = vmatprep.subr.mxu0 0.0
        %365 = vmatpush1.msra.mxu0 0.0
        %366 = vmatprep.subr.mxu0 0.0
        %367 = vmatpush1.msra.mxu0 0.0
        %368 = vmatprep.subr.mxu0 0.0
        %369 = vmatpush1.msra.mxu0 0.0
        %370 = vmatprep.subr.mxu0 0.0
        %371 = vmatpush1.msra.mxu0 0.0
        %372 = vmatprep.subr.mxu0 0.0
        %373 = vmatpush1.msra.mxu0 0.0
        %374 = vmatprep.subr.mxu0 0.0
        %375 = vmatpush1.msra.mxu0 0.0
        %376 = vmatprep.subr.mxu0 0.0
        %377 = vmatpush1.msra.mxu0 0.0
        %378 = vmatprep.mubr.f32.mxu0 0.0
        %379 = vmatmul.mubr.f32.gmra.mrb[0].mxu0 %v309
        %v380 = vpop.f32.mrb[0].mxu0
        %v381 = vadd.f32 0.0, %v380
        %v382 = vpop.f32.mrb[0].mxu0
        %383 = vdwg.mxu0
        %v384 = vld [vmem:[#allocation5 + $0x40] sm:$0x1]
        %v385 = vlaneseq
        %v386 = vshrl.u32 %v385, 7
        %v387 = vsub.s32 0, %v386
        %v388 = vrot.slane %v384, %v387
        %390 = vrot.lane.b32.xlu0 %v388, 15
        %v391 = vpop.permute.xlu0 %390
        %v393 = vmul.f32 %v303, %v391
        %v394 = vsel %vm258, %v393, 0.0
        %395 = vadd.xlane.f32.xlu0 %v394
        %v396 = vpop.xlane.xlu0 %395
        %vm397 = vcmask 64512
        %v399 = vsel %vm397, %v381, 0
        %401 = vmatprep.subr.mxu0 0.0
        %402 = vmatpush1.msra.mxu0 %v174
        %403 = vmatprep.subr.mxu0 0.0
        %404 = vmatpush1.msra.mxu0 0.0
        %405 = vmatprep.subr.mxu0 0.0
        %406 = vmatpush1.msra.mxu0 0.0
        %407 = vmatprep.subr.mxu0 0.0
        %408 = vmatpush1.msra.mxu0 0.0
        %409 = vmatprep.subr.mxu0 0.0
        %410 = vmatpush1.msra.mxu0 0.0
        %411 = vmatprep.subr.mxu0 0.0
        %412 = vmatpush1.msra.mxu0 0.0
        %413 = vmatprep.subr.mxu0 0.0
        %414 = vmatpush1.msra.mxu0 0.0
        %415 = vmatprep.subr.mxu0 0.0
        %416 = vmatpush1.msra.mxu0 0.0
        %417 = vmatprep.subr.mxu0 0.0
        %418 = vmatpush1.msra.mxu0 0.0
        %419 = vmatprep.subr.mxu0 0.0
        %420 = vmatpush1.msra.mxu0 0.0
        %421 = vmatprep.subr.mxu0 0.0
        %422 = vmatpush1.msra.mxu0 0.0
        %423 = vmatprep.subr.mxu0 0.0
        %424 = vmatpush1.msra.mxu0 0.0
        %425 = vmatprep.subr.mxu0 0.0
        %426 = vmatpush1.msra.mxu0 0.0
        %427 = vmatprep.subr.mxu0 0.0
        %428 = vmatpush1.msra.mxu0 0.0
        %429 = vmatprep.subr.mxu0 0.0
        %430 = vmatpush1.msra.mxu0 0.0
        %431 = vmatprep.subr.mxu0 0.0
        %432 = vmatpush1.msra.mxu0 0.0
        %433 = vmatprep.subr.mxu0 0.0
        %434 = vmatpush1.msra.mxu0 0.0
        %435 = vmatprep.subr.mxu0 0.0
        %436 = vmatpush1.msra.mxu0 0.0
        %437 = vmatprep.subr.mxu0 0.0
        %438 = vmatpush1.msra.mxu0 0.0
        %439 = vmatprep.subr.mxu0 0.0
        %440 = vmatpush1.msra.mxu0 0.0
        %441 = vmatprep.subr.mxu0 0.0
        %442 = vmatpush1.msra.mxu0 0.0
        %443 = vmatprep.subr.mxu0 0.0
        %444 = vmatpush1.msra.mxu0 0.0
        %445 = vmatprep.subr.mxu0 0.0
        %446 = vmatpush1.msra.mxu0 0.0
        %447 = vmatprep.subr.mxu0 0.0
        %448 = vmatpush1.msra.mxu0 0.0
        %449 = vmatprep.subr.mxu0 0.0
        %450 = vmatpush1.msra.mxu0 0.0
        %451 = vmatprep.subr.mxu0 0.0
        %452 = vmatpush1.msra.mxu0 0.0
        %453 = vmatprep.subr.mxu0 0.0
        %454 = vmatpush1.msra.mxu0 0.0
        %455 = vmatprep.subr.mxu0 0.0
        %456 = vmatpush1.msra.mxu0 0.0
        %457 = vmatprep.subr.mxu0 0.0
        %458 = vmatpush1.msra.mxu0 0.0
        %459 = vmatprep.subr.mxu0 0.0
        %460 = vmatpush1.msra.mxu0 0.0
        %461 = vmatprep.subr.mxu0 0.0
        %462 = vmatpush1.msra.mxu0 0.0
        %463 = vmatprep.subr.mxu0 0.0
        %464 = vmatpush1.msra.mxu0 0.0
        %465 = vmatprep.mubr.f32.mxu0 0.0
        %466 = vmatmul.mubr.f32.gmra.mrb[0].mxu0 %v399
        %v467 = vpop.f32.mrb[0].mxu0
        %v468 = vadd.f32 %v396, %v467
        %v469 = vpop.f32.mrb[0].mxu0
        %470 = vdwg.mxu0
        %v471 = vld [vmem:[#allocation5 + $0x40] sm:$0xff]
        %v472 = vld [vmem:[#allocation5 + $0x48] sm:$0xff]
        %475 = vrot.lane.b32.xlu0 %v471, 108
        %v476 = vpop.permute.xlu0 %475
        %477 = vrot.lane.b32.xlu0 %v472, 108
        %v478 = vpop.permute.xlu0 %477
        %v479 = vsel %vm397, %v476, 0
        %v481 = vsel %vm397, %v478, 0
        %483 = vmatprep.subr.mxu0 0.0
        %484 = vmatpush1.msra.mxu0 %v174
        %485 = vmatprep.subr.mxu0 0.0
        %486 = vmatpush1.msra.mxu0 0.0
        %487 = vmatprep.subr.mxu0 0.0
        %488 = vmatpush1.msra.mxu0 0.0
        %489 = vmatprep.subr.mxu0 0.0
        %490 = vmatpush1.msra.mxu0 0.0
        %491 = vmatprep.subr.mxu0 0.0
        %492 = vmatpush1.msra.mxu0 0.0
        %493 = vmatprep.subr.mxu0 0.0
        %494 = vmatpush1.msra.mxu0 0.0
        %495 = vmatprep.subr.mxu0 0.0
        %496 = vmatpush1.msra.mxu0 0.0
        %497 = vmatprep.subr.mxu0 0.0
        %498 = vmatpush1.msra.mxu0 0.0
        %499 = vmatprep.subr.mxu0 0.0
        %500 = vmatpush1.msra.mxu0 0.0
        %501 = vmatprep.subr.mxu0 0.0
        %502 = vmatpush1.msra.mxu0 0.0
        %503 = vmatprep.subr.mxu0 0.0
        %504 = vmatpush1.msra.mxu0 0.0
        %505 = vmatprep.subr.mxu0 0.0
        %506 = vmatpush1.msra.mxu0 0.0
        %507 = vmatprep.subr.mxu0 0.0
        %508 = vmatpush1.msra.mxu0 0.0
        %509 = vmatprep.subr.mxu0 0.0
        %510 = vmatpush1.msra.mxu0 0.0
        %511 = vmatprep.subr.mxu0 0.0
        %512 = vmatpush1.msra.mxu0 0.0
        %513 = vmatprep.subr.mxu0 0.0
        %514 = vmatpush1.msra.mxu0 0.0
        %515 = vmatprep.subr.mxu0 0.0
        %516 = vmatpush1.msra.mxu0 0.0
        %517 = vmatprep.subr.mxu0 0.0
        %518 = vmatpush1.msra.mxu0 0.0
        %519 = vmatprep.subr.mxu0 0.0
        %520 = vmatpush1.msra.mxu0 0.0
        %521 = vmatprep.subr.mxu0 0.0
        %522 = vmatpush1.msra.mxu0 0.0
        %523 = vmatprep.subr.mxu0 0.0
        %524 = vmatpush1.msra.mxu0 0.0
        %525 = vmatprep.subr.mxu0 0.0
        %526 = vmatpush1.msra.mxu0 0.0
        %527 = vmatprep.subr.mxu0 0.0
        %528 = vmatpush1.msra.mxu0 0.0
        %529 = vmatprep.subr.mxu0 0.0
        %530 = vmatpush1.msra.mxu0 0.0
        %531 = vmatprep.subr.mxu0 0.0
        %532 = vmatpush1.msra.mxu0 0.0
        %533 = vmatprep.subr.mxu0 0.0
        %534 = vmatpush1.msra.mxu0 0.0
        %535 = vmatprep.subr.mxu0 0.0
        %536 = vmatpush1.msra.mxu0 0.0
        %537 = vmatprep.subr.mxu0 0.0
        %538 = vmatpush1.msra.mxu0 0.0
        %539 = vmatprep.subr.mxu0 0.0
        %540 = vmatpush1.msra.mxu0 0.0
        %541 = vmatprep.subr.mxu0 0.0
        %542 = vmatpush1.msra.mxu0 0.0
        %543 = vmatprep.subr.mxu0 0.0
        %544 = vmatpush1.msra.mxu0 0.0
        %545 = vmatprep.subr.mxu0 0.0
        %546 = vmatpush1.msra.mxu0 0.0
        %547 = vmatprep.mubr.f32.mxu0 0.0
        %548 = vmatmul.mubr.f32.gmra.mrb[0].mxu0 %v479
        %v549 = vpop.f32.mrb[0].mxu0
        %v550 = vadd.f32 0.0, %v549
        %v551 = vpop.f32.mrb[0].mxu0
        %552 = vmatprep.mubr.f32.mxu0 0.0
        %553 = vmatmul.mubr.f32.gmra.mrb[0].mxu0 %v481
        %v554 = vpop.f32.mrb[0].mxu0
        %v555 = vadd.f32 0.0, %v554
        %v556 = vpop.f32.mrb[0].mxu0
        %557 = vdwg.mxu0
        %558 = vset.pattern.permute.xlu0 28
        %559 = vperm.xlu0 %558, %v471
        %v560 = vpop.permute.xlu0 %559
        %562 = vset.pattern.permute.xlu0 28
        %563 = vperm.xlu0 %562, %v472
        %v564 = vpop.permute.xlu0 %563
        %v566 = vadd.f32 %v550, %v560
        %v567 = vadd.f32 %v555, %v564
        %v568 = vsel %vm184, %v566, 0.0
        %v569 = vsel %vm184, %v567, 0.0
        %v570 = vadd.f32 %v568, %v569
        %v571 = vrot.slane %v570, 4
        %v572 = vadd.f32 %v570, %v571
        %v573 = vrot.slane %v572, 2
        %v574 = vadd.f32 %v572, %v573
        %v575 = vrot.slane %v574, 1
        %v576 = vadd.f32 %v574, %v575
        %v577 = vrcp.pop 16.0
        %v578 = vmul.f32 %v576, %v577
        %v579 = vld [vmem:[#allocation5 + $0x40] sm:$0xff]
        %581 = vrot.lane.b32.xlu0 %v579, 99
        %v582 = vpop.permute.xlu0 %581
        %v584 = vmul.f32 %v578, %v582
        %v585 = vsel %vm184, %v584, 0.0
        %586 = vadd.xlane.f32.xlu0 %v585
        %v587 = vpop.xlane.xlu0 %586
        %v588 = vmax.f32 %v587, 0.0
        %v589 = vmul.f32 %v588, %v579
        %vm590 = vcmask 761320
        %v591 = vsel %vm590, %v589, 0.0
        %v592 = vrot.slane %v591, 4
        %v593 = vadd.f32 %v591, %v592
        %v594 = vrot.slane %v593, 2
        %v595 = vadd.f32 %v593, %v594
        %v596 = vrot.slane %v595, 1
        %v597 = vadd.f32 %v595, %v596
        %v598 = vmul.f32 %v597, 0.5
        %v599 = vtanh.pop %v598
        %v600 = vadd.f32 %v599, 1.0
        %v601 = vmul.f32 %v600, 0.5
        %603 = vrot.lane.b32.xlu0 %v601, 67
        %v604 = vpop.permute.xlu0 %603
        %v606 = vmul.f32 %v566, %v604
        %v607 = vmul.f32 %v567, %v604
        %v608 = vsel %vm184, %v606, -inf
        %v609 = vsel %vm184, %v607, -inf
        %v610 = vmax.f32 %v608, %v609
        %v611 = vrot.slane %v610, 4
        %v612 = vmax.f32 %v610, %v611
        %v613 = vrot.slane %v612, 2
        %v614 = vmax.f32 %v612, %v613
        %v615 = vrot.slane %v614, 1
        %v616 = vmax.f32 %v614, %v615
        %v617 = vsub.f32 %v606, %v616
        %v618 = vsub.f32 %v607, %v616
        %v619 = vmul.f32 %v617, 1.442695
        %v620 = vpow.pop %v619
        %v621 = vmul.f32 %v618, 1.442695
        %v622 = vpow.pop %v621
        %v623 = vsel %vm184, %v620, 0.0
        %v624 = vsel %vm184, %v622, 0.0
        %v625 = vadd.f32 %v623, %v624
        %v626 = vrot.slane %v625, 4
        %v627 = vadd.f32 %v625, %v626
        %v628 = vrot.slane %v627, 2
        %v629 = vadd.f32 %v627, %v628
        %v630 = vrot.slane %v629, 1
        %v631 = vadd.f32 %v629, %v630
        %v632 = vrcp.pop %v631
        %v633 = vmul.f32 %v620, %v632
        %v634 = vmul.f32 %v622, %v632
        %636 = vrot.lane.b32.xlu0 %v255, 124
        %v637 = vpop.permute.xlu0 %636
        %vm638 = vcmask 130048
        %v639 = vsel %vm638, %v637, 0
        %641 = vmatprep.subr.mxu0 0.0
        %642 = vmatpush1.msra.mxu0 %v633
        %643 = vmatprep.subr.mxu0 0.0
        %644 = vmatpush1.msra.mxu0 %v634
        %645 = vmatprep.subr.mxu0 0.0
        %646 = vmatpush1.msra.mxu0 0.0
        %647 = vmatprep.subr.mxu0 0.0
        %648 = vmatpush1.msra.mxu0 0.0
        %649 = vmatprep.subr.mxu0 0.0
        %650 = vmatpush1.msra.mxu0 0.0
        %651 = vmatprep.subr.mxu0 0.0
        %652 = vmatpush1.msra.mxu0 0.0
        %653 = vmatprep.subr.mxu0 0.0
        %654 = vmatpush1.msra.mxu0 0.0
        %655 = vmatprep.subr.mxu0 0.0
        %656 = vmatpush1.msra.mxu0 0.0
        %657 = vmatprep.subr.mxu0 0.0
        %658 = vmatpush1.msra.mxu0 0.0
        %659 = vmatprep.subr.mxu0 0.0
        %660 = vmatpush1.msra.mxu0 0.0
        %661 = vmatprep.subr.mxu0 0.0
        %662 = vmatpush1.msra.mxu0 0.0
        %663 = vmatprep.subr.mxu0 0.0
        %664 = vmatpush1.msra.mxu0 0.0
        %665 = vmatprep.subr.mxu0 0.0
        %666 = vmatpush1.msra.mxu0 0.0
        %667 = vmatprep.subr.mxu0 0.0
        %668 = vmatpush1.msra.mxu0 0.0
        %669 = vmatprep.subr.mxu0 0.0
        %670 = vmatpush1.msra.mxu0 0.0
        %671 = vmatprep.subr.mxu0 0.0
        %672 = vmatpush1.msra.mxu0 0.0
        %673 = vmatprep.subr.mxu0 0.0
        %674 = vmatpush1.msra.mxu0 0.0
        %675 = vmatprep.subr.mxu0 0.0
        %676 = vmatpush1.msra.mxu0 0.0
        %677 = vmatprep.subr.mxu0 0.0
        %678 = vmatpush1.msra.mxu0 0.0
        %679 = vmatprep.subr.mxu0 0.0
        %680 = vmatpush1.msra.mxu0 0.0
        %681 = vmatprep.subr.mxu0 0.0
        %682 = vmatpush1.msra.mxu0 0.0
        %683 = vmatprep.subr.mxu0 0.0
        %684 = vmatpush1.msra.mxu0 0.0
        %685 = vmatprep.subr.mxu0 0.0
        %686 = vmatpush1.msra.mxu0 0.0
        %687 = vmatprep.subr.mxu0 0.0
        %688 = vmatpush1.msra.mxu0 0.0
        %689 = vmatprep.subr.mxu0 0.0
        %690 = vmatpush1.msra.mxu0 0.0
        %691 = vmatprep.subr.mxu0 0.0
        %692 = vmatpush1.msra.mxu0 0.0
        %693 = vmatprep.subr.mxu0 0.0
        %694 = vmatpush1.msra.mxu0 0.0
        %695 = vmatprep.subr.mxu0 0.0
        %696 = vmatpush1.msra.mxu0 0.0
        %697 = vmatprep.subr.mxu0 0.0
        %698 = vmatpush1.msra.mxu0 0.0
        %699 = vmatprep.subr.mxu0 0.0
        %700 = vmatpush1.msra.mxu0 0.0
        %701 = vmatprep.subr.mxu0 0.0
        %702 = vmatpush1.msra.mxu0 0.0
        %703 = vmatprep.subr.mxu0 0.0
        %704 = vmatpush1.msra.mxu0 0.0
        %705 = vmatprep.mubr.f32.mxu0 0.0
        %706 = vmatmul.mubr.f32.gmra.mrb[0].mxu0 %v639
        %v707 = vpop.f32.mrb[0].mxu0
        %v708 = vadd.f32 0.0, %v707
        %v709 = vpop.f32.mrb[0].mxu0
        %710 = vdwg.mxu0
        %v711 = vadd.f32 %v468, %v708
        %v712 = vsel %vm184, %v711, 0.0
        %713 = vadd.xlane.f32.xlu0 %v712
        %v714 = vpop.xlane.xlu0 %713
        %v715 = vrcp.pop 32.0
        %v716 = vmul.f32 %v714, %v715
        %v717 = vld [vmem:[#allocation5 + $0x40] sm:$0xff]
        %v718 = vmul.f32 %v716, %v717
        %vm719 = vcmask 810760
        %v720 = vsel %vm719, %v718, 0.0
        %v721 = vrot.slane %v720, 4
        %v722 = vadd.f32 %v720, %v721
        %v723 = vrot.slane %v722, 2
        %v724 = vadd.f32 %v722, %v723
        %v725 = vrot.slane %v724, 1
        %v726 = vadd.f32 %v724, %v725
        %v727 = vld [vmem:[#allocation5 + $0x40] sm:$0x1]
        %729 = vrot.lane.b32.xlu0 %v727, 108
        %v730 = vpop.permute.xlu0 %729
        %v732 = vadd.f32 %v726, %v730
        %v733 = vmul.f32 %v732, 0.5
        %v734 = vmul.f32 %v732, 0.70710677
        %vm735 = vcmp.ge.f32.partialorder %v734, 0.0
        %v736 = vsel %vm735, 1.0, -1.0
        %v737 = vand.u32 2147483647, %v734
        %v738 = vmul.f32 %v737, 0.3275911
        %v739 = vadd.f32 %v738, 1.0
        %v740 = vrcp.pop %v739
        %v741 = vmul.f32 1.0, %v740
        %v742 = vmul.f32 %v741, 1.0614054
        %v743 = vadd.f32 %v742, -1.4531521
        %v744 = vmul.f32 %v743, %v741
        %v745 = vadd.f32 %v744, 1.4214138
        %v746 = vmul.f32 %v745, %v741
        %v747 = vadd.f32 %v746, -0.28449672
        %v748 = vmul.f32 %v747, %v741
        %v749 = vadd.f32 %v748, 0.2548296
        %v750 = vmul.f32 %v749, %v741
        %v751 = vsub.f32 0.0, %v737
        %v752 = vmul.f32 %v751, %v737
        %v753 = vmul.f32 %v752, 1.442695
        %v754 = vpow.pop %v753
        %v755 = vmul.f32 %v750, %v754
        %v756 = vsub.f32 1.0, %v755
        %v757 = vmul.f32 %v736, %v756
        %v758 = vadd.f32 %v757, 1.0
        %v759 = vmul.f32 %v733, %v758
        %v760 = vlaneseq
        %v761 = vshrl.u32 %v760, 7
        %v762 = vsub.s32 0, %v761
        %v763 = vrot.slane %v759, %v762
        %765 = vrot.lane.b32.xlu0 %v717, 126
        %v766 = vpop.permute.xlu0 %765
        %v768 = vmul.f32 %v763, %v766
        %770 = vrot.lane.b32.xlu0 %v768, 31
        %v771 = vpop.permute.xlu0 %770
        %v773 = vsel %vm284, %v771, 0.0
        %774 = vadd.xlane.f32.xlu0 %v773
        %v775 = vpop.xlane.xlu0 %774
        %v776 = vadd.f32 %v775, %v717
        %777 = vrot.lane.b32.xlu0 %v717, 124
        %v778 = vpop.permute.xlu0 %777
        %v780 = vmul.f32 %v763, %v778
        %782 = vrot.lane.b32.xlu0 %v780, 31
        %v783 = vpop.permute.xlu0 %782
        %v785 = vsel %vm284, %v783, 0.0
        %786 = vadd.xlane.f32.xlu0 %v785
        %v787 = vpop.xlane.xlu0 %786
        %v788 = vadd.f32 %v787, %v717
        %790 = vrot.lane.b32.xlu0 %v788, 127
        %v791 = vpop.permute.xlu0 %790
        %v793 = vmax.f32 %v776, %v791
        %v794 = vsub.f32 %v776, %v793
        %v795 = vmul.f32 %v794, 1.442695
        %v796 = vpow.pop %v795
        %798 = vrot.lane.b32.xlu0 %v793, 1
        %v799 = vpop.permute.xlu0 %798
        %v801 = vsub.f32 %v788, %v799
        %v802 = vmul.f32 %v801, 1.442695
        %v803 = vpow.pop %v802
        %805 = vrot.lane.b32.xlu0 %v803, 127
        %v806 = vpop.permute.xlu0 %805
        %v808 = vadd.f32 %v796, %v806
        %v809 = vrcp.pop %v808
        %v810 = vmul.f32 1.0, %v809
        %v811 = vmul.f32 %v796, %v810
        %813 = vset.pattern.permute.xlu0 103
        %814 = vperm.xlu0 %813, %v811
        %v815 = vpop.permute.xlu0 %814
        %v817 = vmul.f32 %v468, %v815
        %819 = vrot.lane.b32.xlu0 %v810, 1
        %v820 = vpop.permute.xlu0 %819
        %v822 = vmul.f32 %v803, %v820
        %824 = vset.pattern.permute.xlu0 104
        %825 = vperm.xlu0 %824, %v822
        %v826 = vpop.permute.xlu0 %825
        %v828 = vmul.f32 %v708, %v826
        %v829 = vadd.f32 %v817, %v828
        %v830 = vld [vmem:[#allocation5] sm:$0xff]
        %v831 = vld [vmem:[#allocation5 + $0x8] sm:$0xff]
        %v832 = vld [vmem:[#allocation5 + $0x10] sm:$0xff]
        %v833 = vld [vmem:[#allocation5 + $0x18] sm:$0xff]
        %v834 = vld [vmem:[#allocation5 + $0x60] sm:$0x1]
        %v835 = vlaneseq
        %v836 = vshrl.u32 %v835, 7
        %v837 = vsub.s32 0, %v836
        %v838 = vrot.slane %v834, %v837
        %843 = vrot.lane.b32.xlu0 %v830, 32
        %v844 = vpop.permute.xlu0 %843
        %845 = vrot.lane.b32.xlu0 %v831, 32
        %v846 = vpop.permute.xlu0 %845
        %847 = vrot.lane.b32.xlu0 %v832, 32
        %v848 = vpop.permute.xlu0 %847
        %849 = vrot.lane.b32.xlu0 %v833, 32
        %v850 = vpop.permute.xlu0 %849
        %856 = vrot.lane.b32.xlu0 %v838, 64
        %v857 = vpop.permute.xlu0 %856
        %v860 = vsel %vm184, %v829, 0
        %862 = vmatprep.subr.mxu0 0.0
        %863 = vmatpush1.msra.mxu0 %v844
        %864 = vmatprep.subr.mxu0 0.0
        %865 = vmatpush1.msra.mxu0 %v846
        %866 = vmatprep.subr.mxu0 0.0
        %867 = vmatpush1.msra.mxu0 %v848
        %868 = vmatprep.subr.mxu0 0.0
        %869 = vmatpush1.msra.mxu0 %v850
        %870 = vmatprep.subr.mxu0 0.0
        %871 = vmatpush1.msra.mxu0 0.0
        %872 = vmatprep.subr.mxu0 0.0
        %873 = vmatpush1.msra.mxu0 0.0
        %874 = vmatprep.subr.mxu0 0.0
        %875 = vmatpush1.msra.mxu0 0.0
        %876 = vmatprep.subr.mxu0 0.0
        %877 = vmatpush1.msra.mxu0 0.0
        %878 = vmatprep.subr.mxu0 0.0
        %879 = vmatpush1.msra.mxu0 0.0
        %880 = vmatprep.subr.mxu0 0.0
        %881 = vmatpush1.msra.mxu0 0.0
        %882 = vmatprep.subr.mxu0 0.0
        %883 = vmatpush1.msra.mxu0 0.0
        %884 = vmatprep.subr.mxu0 0.0
        %885 = vmatpush1.msra.mxu0 0.0
        %886 = vmatprep.subr.mxu0 0.0
        %887 = vmatpush1.msra.mxu0 0.0
        %888 = vmatprep.subr.mxu0 0.0
        %889 = vmatpush1.msra.mxu0 0.0
        %890 = vmatprep.subr.mxu0 0.0
        %891 = vmatpush1.msra.mxu0 0.0
        %892 = vmatprep.subr.mxu0 0.0
        %893 = vmatpush1.msra.mxu0 0.0
        %894 = vmatprep.subr.mxu0 0.0
        %895 = vmatpush1.msra.mxu0 0.0
        %896 = vmatprep.subr.mxu0 0.0
        %897 = vmatpush1.msra.mxu0 0.0
        %898 = vmatprep.subr.mxu0 0.0
        %899 = vmatpush1.msra.mxu0 0.0
        %900 = vmatprep.subr.mxu0 0.0
        %901 = vmatpush1.msra.mxu0 0.0
        %902 = vmatprep.subr.mxu0 0.0
        %903 = vmatpush1.msra.mxu0 0.0
        %904 = vmatprep.subr.mxu0 0.0
        %905 = vmatpush1.msra.mxu0 0.0
        %906 = vmatprep.subr.mxu0 0.0
        %907 = vmatpush1.msra.mxu0 0.0
        %908 = vmatprep.subr.mxu0 0.0
        %909 = vmatpush1.msra.mxu0 0.0
        %910 = vmatprep.subr.mxu0 0.0
        %911 = vmatpush1.msra.mxu0 0.0
        %912 = vmatprep.subr.mxu0 0.0
        %913 = vmatpush1.msra.mxu0 0.0
        %914 = vmatprep.subr.mxu0 0.0
        %915 = vmatpush1.msra.mxu0 0.0
        %916 = vmatprep.subr.mxu0 0.0
        %917 = vmatpush1.msra.mxu0 0.0
        %918 = vmatprep.subr.mxu0 0.0
        %919 = vmatpush1.msra.mxu0 0.0
        %920 = vmatprep.subr.mxu0 0.0
        %921 = vmatpush1.msra.mxu0 0.0
        %922 = vmatprep.subr.mxu0 0.0
        %923 = vmatpush1.msra.mxu0 0.0
        %924 = vmatprep.subr.mxu0 0.0
        %925 = vmatpush1.msra.mxu0 0.0
        %926 = vmatprep.mubr.f32.mxu0 0.0
        %927 = vmatmul.mubr.f32.gmra.mrb[0].mxu0 %v860
        %v928 = vpop.f32.mrb[0].mxu0
        %v929 = vadd.f32 %v857, %v928
        %v930 = vpop.f32.mrb[0].mxu0
        %931 = vdwg.mxu0
        %v932 = vadd.f32 %v174, %v929
        %v933 = vld [vmem:[#allocation5 + $0x68] sm:$0x1]
        %v934 = vsel %vm184, %v932, 0.0
        %935 = vadd.xlane.f32.xlu0 %v934
        %v936 = vpop.xlane.xlu0 %935
        %v937 = vmul.f32 %v936, %v715
        %v938 = vsub.f32 %v932, %v937
        %v939 = vmul.f32 %v938, %v938
        %v940 = vsel %vm184, %v939, 0.0
        %941 = vadd.xlane.f32.xlu0 %v940
        %v942 = vpop.xlane.xlu0 %941
        %v943 = vmul.f32 %v942, %v715
        %v944 = vadd.f32 %v943, 1e-05
        %v945 = vrsqrt.pop %v944
        %v946 = vmul.f32 %v938, %v945
        %v947 = vlaneseq
        %v948 = vshrl.u32 %v947, 7
        %v949 = vsub.s32 0, %v948
        %v950 = vrot.slane %v933, %v949
        %v951 = vmul.f32 %v946, %v950
        %953 = vrot.lane.b32.xlu0 %v950, 96
        %v954 = vpop.permute.xlu0 %953
        %v956 = vadd.f32 %v951, %v954
        %957 = vrot.lane.b32.xlu0 %v830, 96
        %v958 = vpop.permute.xlu0 %957
        %959 = vrot.lane.b32.xlu0 %v831, 96
        %v960 = vpop.permute.xlu0 %959
        %961 = vrot.lane.b32.xlu0 %v832, 96
        %v962 = vpop.permute.xlu0 %961
        %963 = vrot.lane.b32.xlu0 %v833, 96
        %v964 = vpop.permute.xlu0 %963
        %v970 = vsel %vm184, %v956, 0
        %972 = vmatprep.subr.mxu0 0.0
        %973 = vmatpush1.msra.mxu0 %v958
        %974 = vmatprep.subr.mxu0 0.0
        %975 = vmatpush1.msra.mxu0 %v960
        %976 = vmatprep.subr.mxu0 0.0
        %977 = vmatpush1.msra.mxu0 %v962
        %978 = vmatprep.subr.mxu0 0.0
        %979 = vmatpush1.msra.mxu0 %v964
        %980 = vmatprep.subr.mxu0 0.0
        %981 = vmatpush1.msra.mxu0 0.0
        %982 = vmatprep.subr.mxu0 0.0
        %983 = vmatpush1.msra.mxu0 0.0
        %984 = vmatprep.subr.mxu0 0.0
        %985 = vmatpush1.msra.mxu0 0.0
        %986 = vmatprep.subr.mxu0 0.0
        %987 = vmatpush1.msra.mxu0 0.0
        %988 = vmatprep.subr.mxu0 0.0
        %989 = vmatpush1.msra.mxu0 0.0
        %990 = vmatprep.subr.mxu0 0.0
        %991 = vmatpush1.msra.mxu0 0.0
        %992 = vmatprep.subr.mxu0 0.0
        %993 = vmatpush1.msra.mxu0 0.0
        %994 = vmatprep.subr.mxu0 0.0
        %995 = vmatpush1.msra.mxu0 0.0
        %996 = vmatprep.subr.mxu0 0.0
        %997 = vmatpush1.msra.mxu0 0.0
        %998 = vmatprep.subr.mxu0 0.0
        %999 = vmatpush1.msra.mxu0 0.0
        %1000 = vmatprep.subr.mxu0 0.0
        %1001 = vmatpush1.msra.mxu0 0.0
        %1002 = vmatprep.subr.mxu0 0.0
        %1003 = vmatpush1.msra.mxu0 0.0
        %1004 = vmatprep.subr.mxu0 0.0
        %1005 = vmatpush1.msra.mxu0 0.0
        %1006 = vmatprep.subr.mxu0 0.0
        %1007 = vmatpush1.msra.mxu0 0.0
        %1008 = vmatprep.subr.mxu0 0.0
        %1009 = vmatpush1.msra.mxu0 0.0
        %1010 = vmatprep.subr.mxu0 0.0
        %1011 = vmatpush1.msra.mxu0 0.0
        %1012 = vmatprep.subr.mxu0 0.0
        %1013 = vmatpush1.msra.mxu0 0.0
        %1014 = vmatprep.subr.mxu0 0.0
        %1015 = vmatpush1.msra.mxu0 0.0
        %1016 = vmatprep.subr.mxu0 0.0
        %1017 = vmatpush1.msra.mxu0 0.0
        %1018 = vmatprep.subr.mxu0 0.0
        %1019 = vmatpush1.msra.mxu0 0.0
        %1020 = vmatprep.subr.mxu0 0.0
        %1021 = vmatpush1.msra.mxu0 0.0
        %1022 = vmatprep.subr.mxu0 0.0
        %1023 = vmatpush1.msra.mxu0 0.0
        %1024 = vmatprep.subr.mxu0 0.0
        %1025 = vmatpush1.msra.mxu0 0.0
        %1026 = vmatprep.subr.mxu0 0.0
        %1027 = vmatpush1.msra.mxu0 0.0
        %1028 = vmatprep.subr.mxu0 0.0
        %1029 = vmatpush1.msra.mxu0 0.0
        %1030 = vmatprep.subr.mxu0 0.0
        %1031 = vmatpush1.msra.mxu0 0.0
        %1032 = vmatprep.subr.mxu0 0.0
        %1033 = vmatpush1.msra.mxu0 0.0
        %1034 = vmatprep.subr.mxu0 0.0
        %1035 = vmatpush1.msra.mxu0 0.0
        %1036 = vmatprep.mubr.f32.mxu0 0.0
        %1037 = vmatmul.mubr.f32.gmra.mrb[0].mxu0 %v970
        %v1038 = vpop.f32.mrb[0].mxu0
        %v1039 = vadd.f32 %v838, %v1038
        %v1040 = vpop.f32.mrb[0].mxu0
        %1041 = vdwg.mxu0
        %v1042 = vmul.f32 %v1039, 0.5
        %v1043 = vmul.f32 %v1039, 0.70710677
        %vm1044 = vcmp.ge.f32.partialorder %v1043, 0.0
        %v1045 = vsel %vm1044, 1.0, -1.0
        %v1046 = vand.u32 2147483647, %v1043
        %v1047 = vmul.f32 %v1046, 0.3275911
        %v1048 = vadd.f32 %v1047, 1.0
        %v1049 = vrcp.pop %v1048
        %v1050 = vmul.f32 1.0, %v1049
        %v1051 = vmul.f32 %v1050, 1.0614054
        %v1052 = vadd.f32 %v1051, -1.4531521
        %v1053 = vmul.f32 %v1052, %v1050
        %v1054 = vadd.f32 %v1053, 1.4214138
        %v1055 = vmul.f32 %v1054, %v1050
        %v1056 = vadd.f32 %v1055, -0.28449672
        %v1057 = vmul.f32 %v1056, %v1050
        %v1058 = vadd.f32 %v1057, 0.2548296
        %v1059 = vmul.f32 %v1058, %v1050
        %v1060 = vsub.f32 0.0, %v1046
        %v1061 = vmul.f32 %v1060, %v1046
        %v1062 = vmul.f32 %v1061, 1.442695
        %v1063 = vpow.pop %v1062
        %v1064 = vmul.f32 %v1059, %v1063
        %v1065 = vsub.f32 1.0, %v1064
        %v1066 = vmul.f32 %v1045, %v1065
        %v1067 = vadd.f32 %v1066, 1.0
        %v1068 = vmul.f32 %v1042, %v1067
        %v1069 = vld [vmem:[#allocation5] sm:$0xff]
        %v1070 = vld [vmem:[#allocation5 + $0x8] sm:$0xff]
        %v1071 = vld [vmem:[#allocation5 + $0x10] sm:$0xff]
        %v1072 = vld [vmem:[#allocation5 + $0x18] sm:$0xff]
        %v1073 = vld [vmem:[#allocation5 + $0x20] sm:$0xff]
        %v1074 = vld [vmem:[#allocation5 + $0x28] sm:$0xff]
        %v1075 = vld [vmem:[#allocation5 + $0x30] sm:$0xff]
        %v1076 = vld [vmem:[#allocation5 + $0x38] sm:$0xff]
        %1077 = vrot.lane.b32.xlu0 %v838, 32
        %v1078 = vpop.permute.xlu0 %1077
        %vm1080 = vcmask 523264
        %v1082 = vsel %vm1080, %v1068, 0
        %1084 = vmatprep.subr.mxu0 0.0
        %1085 = vmatpush1.msra.mxu0 %v1069
        %1086 = vmatprep.subr.mxu0 0.0
        %1087 = vmatpush1.msra.mxu0 %v1070
        %1088 = vmatprep.subr.mxu0 0.0
        %1089 = vmatpush1.msra.mxu0 %v1071
        %1090 = vmatprep.subr.mxu0 0.0
        %1091 = vmatpush1.msra.mxu0 %v1072
        %1092 = vmatprep.subr.mxu0 0.0
        %1093 = vmatpush1.msra.mxu0 %v1073
        %1094 = vmatprep.subr.mxu0 0.0
        %1095 = vmatpush1.msra.mxu0 %v1074
        %1096 = vmatprep.subr.mxu0 0.0
        %1097 = vmatpush1.msra.mxu0 %v1075
        %1098 = vmatprep.subr.mxu0 0.0
        %1099 = vmatpush1.msra.mxu0 %v1076
        %1100 = vmatprep.subr.mxu0 0.0
        %1101 = vmatpush1.msra.mxu0 0.0
        %1102 = vmatprep.subr.mxu0 0.0
        %1103 = vmatpush1.msra.mxu0 0.0
        %1104 = vmatprep.subr.mxu0 0.0
        %1105 = vmatpush1.msra.mxu0 0.0
        %1106 = vmatprep.subr.mxu0 0.0
        %1107 = vmatpush1.msra.mxu0 0.0
        %1108 = vmatprep.subr.mxu0 0.0
        %1109 = vmatpush1.msra.mxu0 0.0
        %1110 = vmatprep.subr.mxu0 0.0
        %1111 = vmatpush1.msra.mxu0 0.0
        %1112 = vmatprep.subr.mxu0 0.0
        %1113 = vmatpush1.msra.mxu0 0.0
        %1114 = vmatprep.subr.mxu0 0.0
        %1115 = vmatpush1.msra.mxu0 0.0
        %1116 = vmatprep.subr.mxu0 0.0
        %1117 = vmatpush1.msra.mxu0 0.0
        %1118 = vmatprep.subr.mxu0 0.0
        %1119 = vmatpush1.msra.mxu0 0.0
        %1120 = vmatprep.subr.mxu0 0.0
        %1121 = vmatpush1.msra.mxu0 0.0
        %1122 = vmatprep.subr.mxu0 0.0
        %1123 = vmatpush1.msra.mxu0 0.0
        %1124 = vmatprep.subr.mxu0 0.0
        %1125 = vmatpush1.msra.mxu0 0.0
        %1126 = vmatprep.subr.mxu0 0.0
        %1127 = vmatpush1.msra.mxu0 0.0
        %1128 = vmatprep.subr.mxu0 0.0
        %1129 = vmatpush1.msra.mxu0 0.0
        %1130 = vmatprep.subr.mxu0 0.0
        %1131 = vmatpush1.msra.mxu0 0.0
        %1132 = vmatprep.subr.mxu0 0.0
        %1133 = vmatpush1.msra.mxu0 0.0
        %1134 = vmatprep.subr.mxu0 0.0
        %1135 = vmatpush1.msra.mxu0 0.0
        %1136 = vmatprep.subr.mxu0 0.0
        %1137 = vmatpush1.msra.mxu0 0.0
        %1138 = vmatprep.subr.mxu0 0.0
        %1139 = vmatpush1.msra.mxu0 0.0
        %1140 = vmatprep.subr.mxu0 0.0
        %1141 = vmatpush1.msra.mxu0 0.0
        %1142 = vmatprep.subr.mxu0 0.0
        %1143 = vmatpush1.msra.mxu0 0.0
        %1144 = vmatprep.subr.mxu0 0.0
        %1145 = vmatpush1.msra.mxu0 0.0
        %1146 = vmatprep.subr.mxu0 0.0
        %1147 = vmatpush1.msra.mxu0 0.0
        %1148 = vmatprep.mubr.f32.mxu0 0.0
        %1149 = vmatmul.mubr.f32.gmra.mrb[0].mxu0 %v1082
        %v1150 = vpop.f32.mrb[0].mxu0
        %v1151 = vadd.f32 %v1078, %v1150
        %v1152 = vpop.f32.mrb[0].mxu0
        %1153 = vdwg.mxu0
        %v1154 = vadd.f32 %v956, %v1151
        %v1155 = vsel %vm184, %v1154, 0.0
        %1156 = vadd.xlane.f32.xlu0 %v1155
        %v1157 = vpop.xlane.xlu0 %1156
        %v1158 = vmul.f32 %v1157, %v715
        %v1159 = vsub.f32 %v1154, %v1158
        %v1160 = vmul.f32 %v1159, %v1159
        %v1161 = vsel %vm184, %v1160, 0.0
        %1162 = vadd.xlane.f32.xlu0 %v1161
        %v1163 = vpop.xlane.xlu0 %1162
        %v1164 = vmul.f32 %v1163, %v715
        %v1165 = vadd.f32 %v1164, 1e-05
        %v1166 = vrsqrt.pop %v1165
        %v1167 = vmul.f32 %v1159, %v1166
        %1168 = vrot.lane.b32.xlu0 %v950, 64
        %v1169 = vpop.permute.xlu0 %1168
        %v1171 = vmul.f32 %v1167, %v1169
        %1172 = vrot.lane.b32.xlu0 %v950, 32
        %v1173 = vpop.permute.xlu0 %1172
        %v1175 = vadd.f32 %v1171, %v1173
        %1176 = vst.msk [vmem:[%s173] sm:$0xff] %vm184, %v1175
        %s1177 = sand.u32 %s75, 1
        %s1178 = scalar_lea.sflag [#allocation4], %s1177
        %s1179 = sand.u32 %s75, 1
        %s1180 = smul.addr %s1179, 8
        %s1181 = scalar_lea.vmem [#allocation7], %s1180
        // Predicated region
        $region37: #{tpu_custom_call.1} parent=27 // pred_check
          %p1182 = pneg %p85
        $region38: #{tpu_custom_call.1} parent=27 // pred_check_branch
          %1184 = sbr.rel (%p1182) target = $region40
        $region39: #{tpu_custom_call.1} parent=27 // pred_region
          %s1186 = ssub.s32 128, 128
          %1187 = vsyncadd %s1178, %s1186
          %s1188 = smul.addr %s20, 128
          %s1189 = scalar_lea.hbm %s2, %s1188
          %s1191 = sshll.u32 %s1181, 4
          %s1192 = int_to_ptr.vmem [resolvable:$true] %s1191
          %1194 = dma.vmem_to_hbm [thread:$0]  %s1192, 128, %s1189, %s1178
        $region40: #{tpu_custom_call.1} parent=27 // pred_fallthru
          _
      $region28: #{tpu_custom_call.1} parent=5 // pred_fallthru
        _
      %p1195 = scmp.le.s32.totalorder 2, %s15
      // Predicated region
      $region41: #{tpu_custom_call.1} parent=5 // pred_check
        %p1196 = pneg %p1195
      $region42: #{tpu_custom_call.1} parent=5 // pred_check_branch
        %1198 = sbr.rel (%p1196) target = $region44
      $region43: #{tpu_custom_call.1} parent=5 // pred_region
        %s1199 = ssub.s32 %s15, 2
        // Predicated region
        $region45: #{tpu_custom_call.1} parent=43 // pred_check
          %p1200 = pneg %p91
        $region46: #{tpu_custom_call.1} parent=43 // pred_check_branch
          %1202 = sbr.rel (%p1200) target = $region48
        $region47: #{tpu_custom_call.1} parent=43 // pred_region
          %s1203 = sand.u32 %s76, 1
          %s1204 = scalar_lea.sflag [#allocation4], %s1203
          %s1205 = sand.u32 %s76, 1
          %s1206 = smul.addr %s1205, 8
          %s1207 = scalar_lea.vmem [#allocation7], %s1206
          %1208 = dma.done %s1204, 128
        $region48: #{tpu_custom_call.1} parent=43 // pred_fallthru
          _
      $region44: #{tpu_custom_call.1} parent=5 // pred_fallthru
        _
    $region6: #{tpu_custom_call.1} parent=1 // loop_footer
      %s19 = sadd.s32 1, %s15
    $region7: #{tpu_custom_call.1} parent=1 // loop_footer_branch
      %14 = sbr.rel target = $region3
    $region8: #{tpu_custom_call.1} parent=1 // loop_exit
      _
    %1209 = vsyncpa [#allocation3], 1
    %s1210 = scalar_lea.sflag [#allocation3], 1
    %1211 = vsyncpa %s1210, 1
    %1212 = vsyncpa [#allocation6], 1
    %1213 = vsyncpa [#allocation4], 1
    %s1214 = scalar_lea.sflag [#allocation4], 1
    %1215 = vsyncpa %s1214, 1

</llo_original>
